<compile_context>
chip_gen: v5e
topology: v5e:2x2
jax: 0.10.0
libtpu: 0.0.40
codegen_flags: <defaults>
</compile_context>

<pallas_src>
import functools

import jax
import jax.numpy as jnp
from jax.experimental import pallas as pl
from jax.experimental.pallas import tpu as pltpu


_VMEM_SAFE_CAP = 48 * 1024 * 1024   # leaves headroom inside v7x's 64 MiB / TC
_SLAB_GROUP = 8                     # logical rows packed per lane-dense slab row
_BATCH_ALIGN = 8 * _SLAB_GROUP      # 64: keeps slab blocks (8,128)-aligned


def _round_up(a, b):
    return ((a + b - 1) // b) * b


def _slab_ok(dim):
    # 8 rows of `dim` values must tile the 128-lane vreg exactly.
    return dim >= 1 and (_SLAB_GROUP * dim) % 128 == 0


def _rep_to_slab(rep, dim, group):
    """(bt, group*dim) row-replicated value -> (bt//group, group*dim) dense slab.

    rep[r, j*dim + c] holds value[r, c] for every j (weights were pre-tiled), so
        slab[g, j*dim + c] = value[group*g + j, c]
    which is exactly the row-major byte layout of the logical (bt, dim) array:
    the wrapper recovers it with a free jnp.reshape.
    """
    bt, width = rep.shape
    row_in_group = jax.lax.broadcasted_iota(jnp.int32, (bt, width), 0) % group
    col = jax.lax.broadcasted_iota(jnp.int32, (bt, width), 1)
    off = col - row_in_group * dim
    keep = jnp.logical_and(off >= 0, off < dim)
    masked = jnp.where(keep, rep, jnp.zeros_like(rep))
    # (bt, width) -> (bt//group, group, width) splits the sublane axis by the
    # native tile factor (layout-preserving); the axis-1 sum collapses each
    # 8-row group onto one lane-dense slab row.
    return masked.reshape(bt // group, group, width).sum(axis=1)


def _autoencoder_kernel(
    x_ref,                     # (batch_tile, input_dim)                  pipelined
    w_e1_ref, w_e2_ref,        # (input_dim, hidden), (hidden, lat_w)     VMEM-resident
    w_d1_ref, w_d2_ref,        # (latent, hidden),    (hidden, rec_w)     VMEM-resident
    b_ref,                     # (4, bias_width) f32 packed biases        VMEM-resident
    recon_ref, latent_ref,     # lane-dense slabs (or plain (bt, dim) fallback)
    *, input_dim, hidden_dim, latent_dim, slab_rec, slab_lat,
):
    w_dt = w_e1_ref.dtype
    lat_w = w_e2_ref.shape[1]
    rec_w = w_d2_ref.shape[1]

    x = x_ref[...].astype(w_dt)                      # wrapper pre-casts -> no-op

    # Packed biases: row 0 = b_e1, 1 = b_e2(_wide), 2 = b_d1, 3 = b_d2(_wide).
    b_e1 = b_ref[0:1, 0:hidden_dim]
    b_e2 = b_ref[1:2, 0:lat_w]
    b_d1 = b_ref[2:3, 0:hidden_dim]
    b_d2 = b_ref[3:4, 0:rec_w]

    # ---- encoder ----  (bf16 MXU operands, f32 accumulation + f32 elementwise)
    h1 = jnp.dot(x, w_e1_ref[...], preferred_element_type=jnp.float32) + b_e1
    h1 = jnp.maximum(h1, 0.0)                                           # ReLU
    # w_e2 is pre-tiled 8x along its output dim, so this matmul directly emits
    # the latent values replicated into a lane-dense (bt, 8*latent_dim) layout.
    lat_rep = jnp.dot(h1.astype(w_dt), w_e2_ref[...],
                      preferred_element_type=jnp.float32) + b_e2
    latent = lat_rep[:, :latent_dim]

    # ---- decoder ----
    h2 = jnp.dot(latent.astype(w_dt), w_d1_ref[...],
                 preferred_element_type=jnp.float32) + b_d1
    h2 = jnp.maximum(h2, 0.0)                                           # ReLU
    rec_rep = jnp.dot(h2.astype(w_dt), w_d2_ref[...],
                      preferred_element_type=jnp.float32) + b_d2

    if slab_lat:
        latent_ref[...] = _rep_to_slab(
            lat_rep, latent_dim, _SLAB_GROUP).astype(latent_ref.dtype)
    else:
        latent_ref[...] = latent.astype(latent_ref.dtype)
    if slab_rec:
        recon_ref[...] = _rep_to_slab(
            rec_rep, input_dim, _SLAB_GROUP).astype(recon_ref.dtype)
    else:
        recon_ref[...] = rec_rep[:, :input_dim].astype(recon_ref.dtype)
    # TODO(synk): x could also be fed as a (bt*input_dim/128, 128) slab; the
    # inverse in-kernel relayout (per-row lane rotate) is not implemented here.
    # TODO(synk): optional W_e2 @ W_d1 fusion (3-matmul chain) skipped to keep
    # numerics identical to the reference.


def prepare_params(params, weight_dtype=jnp.bfloat16):
    """One-time parameter prep (hoisted out of the per-call path).

    Weights are cast to `weight_dtype` and kept (in_features, out_features);
    the encoder-output / decoder-output weights + biases are pre-tiled 8x along
    their output dim when the dim allows lane-dense slab outputs; the 4 tiny
    biases are packed into one (4, bias_width) f32 buffer (single DMA).
    """
    w_e1, b_e1, w_e2, b_e2, w_d1, b_d1, w_d2, b_d2 = params
    input_dim = w_e1.shape[0]
    latent_dim = w_e2.shape[1]

    def as_row(b):
        return jnp.reshape(jnp.asarray(b, jnp.float32), (1, -1))

    b_e1, b_e2, b_d1, b_d2 = map(as_row, (b_e1, b_e2, b_d1, b_d2))

    if _slab_ok(latent_dim):
        w_e2 = jnp.tile(w_e2, (1, _SLAB_GROUP))
        b_e2 = jnp.tile(b_e2, (1, _SLAB_GROUP))
    if _slab_ok(input_dim):
        w_d2 = jnp.tile(w_d2, (1, _SLAB_GROUP))
        b_d2 = jnp.tile(b_d2, (1, _SLAB_GROUP))

    bias_width = _round_up(
        max(b_e1.shape[1], b_e2.shape[1], b_d1.shape[1], b_d2.shape[1], 128), 128)

    def pad_row(b):
        return jnp.pad(b, ((0, 0), (0, bias_width - b.shape[1])))

    b_pack = jnp.concatenate(
        [pad_row(b_e1), pad_row(b_e2), pad_row(b_d1), pad_row(b_d2)], axis=0)

    to_w = lambda w: jnp.asarray(w, weight_dtype)
    return (to_w(w_e1), to_w(w_e2), to_w(w_d1), to_w(w_d2), b_pack)


def _choose_tiling(batch):
    # Single grid step for small/moderate batches (the grid is a serial loop on
    # 1-TC v5e/v6e; a forced 2nd step is pure overhead).  For big batches use
    # ~2048-row tiles, and >=2 "parallel" steps once batch >= 1024 so v7x's two
    # TensorCores each get >=512-row tiles.
    n_steps = max(1, pl.cdiv(batch, 2048))
    if batch >= 1024:
        n_steps = max(n_steps, 2)
    batch_tile = _round_up(pl.cdiv(batch, n_steps), _BATCH_ALIGN)
    return batch_tile, n_steps


def _vmem_estimate_bytes(batch_tile, input_dim, hidden_dim, latent_dim, lat_w, rec_w,
                         x_itemsize, out_itemsize, w_itemsize, bias_width):
    io = (2 * batch_tile * input_dim * x_itemsize
          + 2 * batch_tile * (input_dim + latent_dim) * out_itemsize)
    w = (input_dim * hidden_dim + hidden_dim * lat_w
         + latent_dim * hidden_dim + hidden_dim * rec_w) * w_itemsize
    b = 4 * bias_width * 4
    interm = batch_tile * (2 * hidden_dim + 2 * (lat_w + rec_w)) * 4
    return io + w + b + interm


def timeseries_autoencoder_forward(x, prepared_params, *, batch_tile=None,
                                   vmem_limit_bytes=None):
    """Fused MLP autoencoder forward. Returns (reconstructed, latent)."""
    batch, input_dim = x.shape
    w_e1, w_e2, w_d1, w_d2, b_pack = prepared_params
    hidden_dim = w_e1.shape[1]
    latent_dim = w_d1.shape[0]
    lat_w = w_e2.shape[1]
    rec_w = w_d2.shape[1]
    slab_lat = _slab_ok(latent_dim) and lat_w == _SLAB_GROUP * latent_dim
    slab_rec = _slab_ok(input_dim) and rec_w == _SLAB_GROUP * input_dim
    bias_width = b_pack.shape[1]
    out_dtype = x.dtype

    if batch_tile is None:
        batch_tile, n_steps = _choose_tiling(batch)
    else:
        batch_tile = _round_up(max(int(batch_tile), _BATCH_ALIGN), _BATCH_ALIGN)
        n_steps = pl.cdiv(batch, batch_tile)

    x_itemsize = jnp.dtype(w_e1.dtype).itemsize
    out_itemsize = jnp.dtype(out_dtype).itemsize
    w_itemsize = jnp.dtype(w_e1.dtype).itemsize

    # Safety net: shrink the tile if the working set would blow the VMEM budget
    # (never triggers at these model sizes).
    while batch_tile > _BATCH_ALIGN and _vmem_estimate_bytes(
            batch_tile, input_dim, hidden_dim, latent_dim, lat_w, rec_w,
            x_itemsize, out_itemsize, w_itemsize, bias_width) > (3 * _VMEM_SAFE_CAP) // 4:
        batch_tile = _round_up(batch_tile // 2, _BATCH_ALIGN)
        n_steps = pl.cdiv(batch, batch_tile)

    padded_batch = batch_tile * n_steps

    # Cast x to the weight dtype in the wrapper (halves the x DMA, drops the
    # per-tile VPU cast); the small alignment pad fuses with the cast under jit.
    x_p = jnp.asarray(x, w_e1.dtype)
    if padded_batch != batch:
        x_p = jnp.pad(x_p, ((0, padded_batch - batch), (0, 0)))

    if vmem_limit_bytes is None:
        est = _vmem_estimate_bytes(batch_tile, input_dim, hidden_dim, latent_dim,
                                   lat_w, rec_w, x_itemsize, out_itemsize,
                                   w_itemsize, bias_width)
        vmem_limit_bytes = int(min(_VMEM_SAFE_CAP, max(32 * 1024 * 1024, 2 * est)))

    kernel = functools.partial(
        _autoencoder_kernel, input_dim=input_dim, hidden_dim=hidden_dim,
        latent_dim=latent_dim, slab_rec=slab_rec, slab_lat=slab_lat)

    # Grid-invariant weights / packed bias: whole-array VMEM residents
    # (single copy, no per-step double-buffering).
    resident = pl.BlockSpec(memory_space=pltpu.MemorySpace.VMEM)

    if slab_rec:
        recon_shape = (padded_batch // _SLAB_GROUP, rec_w)
        recon_spec = pl.BlockSpec((batch_tile // _SLAB_GROUP, rec_w), lambda i: (i, 0))
    else:
        recon_shape = (padded_batch, input_dim)
        recon_spec = pl.BlockSpec((batch_tile, input_dim), lambda i: (i, 0))
    if slab_lat:
        latent_shape = (padded_batch // _SLAB_GROUP, lat_w)
        latent_spec = pl.BlockSpec((batch_tile // _SLAB_GROUP, lat_w), lambda i: (i, 0))
    else:
        latent_shape = (padded_batch, latent_dim)
        latent_spec = pl.BlockSpec((batch_tile, latent_dim), lambda i: (i, 0))

    recon, latent = pl.pallas_call(
        kernel,
        out_shape=(jax.ShapeDtypeStruct(recon_shape, out_dtype),
                   jax.ShapeDtypeStruct(latent_shape, out_dtype)),
        grid=(n_steps,),
        in_specs=[
            pl.BlockSpec((batch_tile, input_dim), lambda i: (i, 0)),  # x (pipelined)
            resident, resident, resident, resident,                    # weights
            resident,                                                  # packed biases
        ],
        out_specs=(recon_spec, latent_spec),
        compiler_params=pltpu.CompilerParams(
            dimension_semantics=("parallel",),
            vmem_limit_bytes=vmem_limit_bytes,
        ),
    )(x_p, w_e1, w_e2, w_d1, w_d2, b_pack)

    # Slab outputs are bit-identical row-major views -> reshape back is free.
    if slab_rec:
        recon = recon.reshape(padded_batch, input_dim)
    if slab_lat:
        latent = latent.reshape(padded_batch, latent_dim)
    if padded_batch != batch:
        recon = recon[:batch]
        latent = latent[:batch]
    return recon, latent


def init_params(key, input_dim, hidden_dim, latent_dim):
    """PyTorch nn.Linear-style init. Weights stored (in_features, out_features), f32."""
    keys = jax.random.split(key, 8)

    def lin(kw, kb, fan_in, fan_out):
        bound = 1.0 / (fan_in ** 0.5)
        w = jax.random.uniform(kw, (fan_in, fan_out), jnp.float32, -bound, bound)
        b = jax.random.uniform(kb, (1, fan_out), jnp.float32, -bound, bound)
        return w, b

    w_e1, b_e1 = lin(keys[0], keys[1], input_dim, hidden_dim)
    w_e2, b_e2 = lin(keys[2], keys[3], hidden_dim, latent_dim)
    w_d1, b_d1 = lin(keys[4], keys[5], latent_dim, hidden_dim)
    w_d2, b_d2 = lin(keys[6], keys[7], hidden_dim, input_dim)
    return (w_e1, b_e1, w_e2, b_e2, w_d1, b_d1, w_d2, b_d2)


def reference_forward(x, params, weight_dtype=jnp.bfloat16):
    """Pure-JAX reference with the same dtype handling as the kernel."""
    w_e1, b_e1, w_e2, b_e2, w_d1, b_d1, w_d2, b_d2 = params

    def lin(h, w, b):
        w = w.astype(weight_dtype)
        return jnp.dot(h.astype(weight_dtype), w,
                       preferred_element_type=jnp.float32) + b

    h1 = jnp.maximum(lin(x, w_e1, b_e1), 0.0)
    latent = lin(h1, w_e2, b_e2)
    h2 = jnp.maximum(lin(latent, w_d1, b_d1), 0.0)
    recon = lin(h2, w_d2, b_d2)
    return recon.astype(x.dtype), latent.astype(x.dtype)


if __name__ == "__main__":
    input_dim, hidden_dim, latent_dim = 16, 64, 32
    batch = 256

    key = jax.random.PRNGKey(0)
    k_x, k_p, k_x2 = jax.random.split(key, 3)
    x = jax.random.normal(k_x, (batch, input_dim), dtype=jnp.float32)

    raw_params = init_params(k_p, input_dim, hidden_dim, latent_dim)
    prepared = prepare_params(raw_params, weight_dtype=jnp.bfloat16)  # hoisted, one-time

    fwd = jax.jit(timeseries_autoencoder_forward)

    recon, latent = fwd(x, prepared)
    jax.block_until_ready((recon, latent))
    recon_ref, latent_ref = reference_forward(x, raw_params)
    assert recon.shape == (batch, input_dim)
    assert latent.shape == (batch, latent_dim)
    assert jnp.allclose(recon, recon_ref, atol=2e-4, rtol=2e-4)
    assert jnp.allclose(latent, latent_ref, atol=2e-4, rtol=2e-4)

    # Ragged batch: padded to the 64-row slab alignment inside the wrapper.
    x2 = jax.random.normal(k_x2, (10, input_dim), dtype=jnp.float32)
    recon2, latent2 = fwd(x2, prepared)
    jax.block_until_ready((recon2, latent2))
    recon2_ref, latent2_ref = reference_forward(x2, raw_params)
    assert recon2.shape == (10, input_dim) and latent2.shape == (10, latent_dim)
    assert jnp.allclose(recon2, recon2_ref, atol=2e-4, rtol=2e-4)
    assert jnp.allclose(latent2, latent2_ref, atol=2e-4, rtol=2e-4)

    print("KERNEL_OK")
</pallas_src>

<mosaic_0001>
module attributes {stable_mosaic.version = 11 : i64} {
  func.func @_autoencoder_kernel(%arg0: i32, %arg1: memref<256x16xbf16, #tpu.memory_space<vmem>>, %arg2: memref<16x64xbf16, #tpu.memory_space<vmem>>, %arg3: memref<64x256xbf16, #tpu.memory_space<vmem>>, %arg4: memref<32x64xbf16, #tpu.memory_space<vmem>>, %arg5: memref<64x128xbf16, #tpu.memory_space<vmem>>, %arg6: memref<4x256xf32, #tpu.memory_space<vmem>>, %arg7: memref<32x128xf32, #tpu.memory_space<vmem>>, %arg8: memref<32x256xf32, #tpu.memory_space<vmem>>) attributes {dimension_semantics = [#tpu.dimension_semantics<parallel>], iteration_bounds = array<i64: 1>, scalar_prefetch = 0 : i64, scratch_operands = 0 : i64, tpu.core_type = #tpu.core_type<tc>, window_params = [{transform_indices = @transform_0, window_bounds = array<i64: 256, 16>}, {pipeline_mode = #tpu.pipeline_mode<synchronous>, transform_indices = @transform_1, window_bounds = array<i64: 16, 64>}, {pipeline_mode = #tpu.pipeline_mode<synchronous>, transform_indices = @transform_2, window_bounds = array<i64: 64, 256>}, {pipeline_mode = #tpu.pipeline_mode<synchronous>, transform_indices = @transform_3, window_bounds = array<i64: 32, 64>}, {pipeline_mode = #tpu.pipeline_mode<synchronous>, transform_indices = @transform_4, window_bounds = array<i64: 64, 128>}, {pipeline_mode = #tpu.pipeline_mode<synchronous>, transform_indices = @transform_5, window_bounds = array<i64: 4, 256>}, {transform_indices = @transform_6, window_bounds = array<i64: 32, 128>}, {transform_indices = @transform_7, window_bounds = array<i64: 32, 256>}]} {
    %c0 = arith.constant 0 : index
    %c0_0 = arith.constant 0 : index
    %0 = vector.load %arg1[%c0, %c0_0] : memref<256x16xbf16, #tpu.memory_space<vmem>>, vector<256x16xbf16>
    %c0_1 = arith.constant 0 : index
    %c0_2 = arith.constant 0 : index
    %1 = vector.load %arg6[%c0_1, %c0_2] : memref<4x256xf32, #tpu.memory_space<vmem>>, vector<1x64xf32>
    %c1 = arith.constant 1 : index
    %c0_3 = arith.constant 0 : index
    %2 = vector.load %arg6[%c1, %c0_3] : memref<4x256xf32, #tpu.memory_space<vmem>>, vector<1x256xf32>
    %c2 = arith.constant 2 : index
    %c0_4 = arith.constant 0 : index
    %3 = vector.load %arg6[%c2, %c0_4] : memref<4x256xf32, #tpu.memory_space<vmem>>, vector<1x64xf32>
    %c3 = arith.constant 3 : index
    %c0_5 = arith.constant 0 : index
    %4 = vector.load %arg6[%c3, %c0_5] : memref<4x256xf32, #tpu.memory_space<vmem>>, vector<1x128xf32>
    %c0_6 = arith.constant 0 : index
    %c0_7 = arith.constant 0 : index
    %5 = vector.load %arg2[%c0_6, %c0_7] : memref<16x64xbf16, #tpu.memory_space<vmem>>, vector<16x64xbf16>
    %cst = arith.constant dense<0.000000e+00> : vector<256x64xf32>
    %6 = tpu.matmul %0, %5, %cst {dimension_numbers = #tpu.dot_dimension_numbers<[1], [0], [0], [1], [0, 0, 1, 1], [], []>} : vector<256x16xbf16>, vector<16x64xbf16>, vector<256x64xf32> -> vector<256x64xf32>
    %7 = vector.broadcast %1 : vector<1x64xf32> to vector<256x64xf32>
    %8 = arith.addf %6, %7 : vector<256x64xf32>
    %cst_8 = arith.constant 0.000000e+00 : f32
    %9 = vector.broadcast %cst_8 : f32 to vector<256x64xf32>
    %10 = arith.maximumf %8, %9 : vector<256x64xf32>
    %11 = arith.truncf %10 : vector<256x64xf32> to vector<256x64xbf16>
    %c0_9 = arith.constant 0 : index
    %c0_10 = arith.constant 0 : index
    %12 = vector.load %arg3[%c0_9, %c0_10] : memref<64x256xbf16, #tpu.memory_space<vmem>>, vector<64x256xbf16>
    %cst_11 = arith.constant dense<0.000000e+00> : vector<256x256xf32>
    %13 = tpu.matmul %11, %12, %cst_11 {dimension_numbers = #tpu.dot_dimension_numbers<[1], [0], [0], [1], [0, 0, 1, 1], [], []>} : vector<256x64xbf16>, vector<64x256xbf16>, vector<256x256xf32> -> vector<256x256xf32>
    %14 = vector.broadcast %2 : vector<1x256xf32> to vector<256x256xf32>
    %15 = arith.addf %13, %14 : vector<256x256xf32>
    %16 = vector.extract_strided_slice %15 {offsets = [0, 0], sizes = [256, 32], strides = [1, 1]} : vector<256x256xf32> to vector<256x32xf32>
    %17 = arith.truncf %16 : vector<256x32xf32> to vector<256x32xbf16>
    %c0_12 = arith.constant 0 : index
    %c0_13 = arith.constant 0 : index
    %18 = vector.load %arg4[%c0_12, %c0_13] : memref<32x64xbf16, #tpu.memory_space<vmem>>, vector<32x64xbf16>
    %cst_14 = arith.constant dense<0.000000e+00> : vector<256x64xf32>
    %19 = tpu.matmul %17, %18, %cst_14 {dimension_numbers = #tpu.dot_dimension_numbers<[1], [0], [0], [1], [0, 0, 1, 1], [], []>} : vector<256x32xbf16>, vector<32x64xbf16>, vector<256x64xf32> -> vector<256x64xf32>
    %20 = vector.broadcast %3 : vector<1x64xf32> to vector<256x64xf32>
    %21 = arith.addf %19, %20 : vector<256x64xf32>
    %cst_15 = arith.constant 0.000000e+00 : f32
    %22 = vector.broadcast %cst_15 : f32 to vector<256x64xf32>
    %23 = arith.maximumf %21, %22 : vector<256x64xf32>
    %24 = arith.truncf %23 : vector<256x64xf32> to vector<256x64xbf16>
    %c0_16 = arith.constant 0 : index
    %c0_17 = arith.constant 0 : index
    %25 = vector.load %arg5[%c0_16, %c0_17] : memref<64x128xbf16, #tpu.memory_space<vmem>>, vector<64x128xbf16>
    %cst_18 = arith.constant dense<0.000000e+00> : vector<256x128xf32>
    %26 = tpu.matmul %24, %25, %cst_18 {dimension_numbers = #tpu.dot_dimension_numbers<[1], [0], [0], [1], [0, 0, 1, 1], [], []>} : vector<256x64xbf16>, vector<64x128xbf16>, vector<256x128xf32> -> vector<256x128xf32>
    %27 = vector.broadcast %4 : vector<1x128xf32> to vector<256x128xf32>
    %28 = arith.addf %26, %27 : vector<256x128xf32>
    %29 = tpu.iota {dimensions = array<i32: 0>} : vector<256x256xi32>
    %c8_i32 = arith.constant 8 : i32
    %c0_i32 = arith.constant 0 : i32
    %30 = arith.cmpi eq, %c8_i32, %c0_i32 : i32
    %c1_i32 = arith.constant 1 : i32
    %31 = arith.select %30, %c1_i32, %c8_i32 : i32
    %32 = vector.broadcast %31 : i32 to vector<256x256xi32>
    %33 = arith.remsi %29, %32 : vector<256x256xi32>
    %c0_i32_19 = arith.constant 0 : i32
    %34 = vector.broadcast %c0_i32_19 : i32 to vector<256x256xi32>
    %35 = arith.cmpi ne, %33, %34 : vector<256x256xi32>
    %c0_i32_20 = arith.constant 0 : i32
    %36 = vector.broadcast %c0_i32_20 : i32 to vector<256x256xi32>
    %37 = arith.cmpi slt, %33, %36 : vector<256x256xi32>
    %c0_i32_21 = arith.constant 0 : i32
    %38 = arith.cmpi slt, %31, %c0_i32_21 : i32
    %39 = vector.broadcast %38 : i1 to vector<256x256xi1>
    %40 = vector.broadcast %39 : vector<256x256xi1> to vector<256x256xi1>
    %41 = arith.xori %37, %40 : vector<256x256xi1>
    %42 = arith.andi %41, %35 : vector<256x256xi1>
    %43 = vector.broadcast %31 : i32 to vector<256x256xi32>
    %44 = arith.addi %33, %43 : vector<256x256xi32>
    %45 = arith.select %42, %44, %33 : vector<256x256xi1>, vector<256x256xi32>
    %46 = tpu.iota {dimensions = array<i32: 1>} : vector<256x256xi32>
    %c32_i32 = arith.constant 32 : i32
    %47 = vector.broadcast %c32_i32 : i32 to vector<256x256xi32>
    %48 = arith.muli %45, %47 : vector<256x256xi32>
    %49 = arith.subi %46, %48 : vector<256x256xi32>
    %c0_i32_22 = arith.constant 0 : i32
    %50 = vector.broadcast %c0_i32_22 : i32 to vector<256x256xi32>
    %51 = arith.cmpi sge, %49, %50 : vector<256x256xi32>
    %c32_i32_23 = arith.constant 32 : i32
    %52 = vector.broadcast %c32_i32_23 : i32 to vector<256x256xi32>
    %53 = arith.cmpi slt, %49, %52 : vector<256x256xi32>
    %54 = arith.andi %51, %53 : vector<256x256xi1>
    %cst_24 = arith.constant 0.000000e+00 : f32
    %55 = vector.broadcast %cst_24 : f32 to vector<256x256xf32>
    %56 = arith.select %54, %15, %55 : vector<256x256xi1>, vector<256x256xf32>
    %57 = vector.shape_cast %56 : vector<256x256xf32> to vector<32x8x256xf32>
    %cst_25 = arith.constant dense<0.000000e+00> : vector<32x256xf32>
    %58 = vector.multi_reduction <add>, %57, %cst_25 [1] : vector<32x8x256xf32> to vector<32x256xf32>
    %c0_26 = arith.constant 0 : index
    %c0_27 = arith.constant 0 : index
    %59 = vector.load %arg8[%c0_26, %c0_27] : memref<32x256xf32, #tpu.memory_space<vmem>>, vector<32x256xf32>
    tpu.vector_store %arg8[%c0_26, %c0_27], %58 {strides = array<i32>} : memref<32x256xf32, #tpu.memory_space<vmem>>, vector<32x256xf32>,
    %60 = tpu.iota {dimensions = array<i32: 0>} : vector<256x128xi32>
    %c8_i32_28 = arith.constant 8 : i32
    %c0_i32_29 = arith.constant 0 : i32
    %61 = arith.cmpi eq, %c8_i32_28, %c0_i32_29 : i32
    %c1_i32_30 = arith.constant 1 : i32
    %62 = arith.select %61, %c1_i32_30, %c8_i32_28 : i32
    %63 = vector.broadcast %62 : i32 to vector<256x128xi32>
    %64 = arith.remsi %60, %63 : vector<256x128xi32>
    %c0_i32_31 = arith.constant 0 : i32
    %65 = vector.broadcast %c0_i32_31 : i32 to vector<256x128xi32>
    %66 = arith.cmpi ne, %64, %65 : vector<256x128xi32>
    %c0_i32_32 = arith.constant 0 : i32
    %67 = vector.broadcast %c0_i32_32 : i32 to vector<256x128xi32>
    %68 = arith.cmpi slt, %64, %67 : vector<256x128xi32>
    %c0_i32_33 = arith.constant 0 : i32
    %69 = arith.cmpi slt, %62, %c0_i32_33 : i32
    %70 = vector.broadcast %69 : i1 to vector<256x128xi1>
    %71 = vector.broadcast %70 : vector<256x128xi1> to vector<256x128xi1>
    %72 = arith.xori %68, %71 : vector<256x128xi1>
    %73 = arith.andi %72, %66 : vector<256x128xi1>
    %74 = vector.broadcast %62 : i32 to vector<256x128xi32>
    %75 = arith.addi %64, %74 : vector<256x128xi32>
    %76 = arith.select %73, %75, %64 : vector<256x128xi1>, vector<256x128xi32>
    %77 = tpu.iota {dimensions = array<i32: 1>} : vector<256x128xi32>
    %c16_i32 = arith.constant 16 : i32
    %78 = vector.broadcast %c16_i32 : i32 to vector<256x128xi32>
    %79 = arith.muli %76, %78 : vector<256x128xi32>
    %80 = arith.subi %77, %79 : vector<256x128xi32>
    %c0_i32_34 = arith.constant 0 : i32
    %81 = vector.broadcast %c0_i32_34 : i32 to vector<256x128xi32>
    %82 = arith.cmpi sge, %80, %81 : vector<256x128xi32>
    %c16_i32_35 = arith.constant 16 : i32
    %83 = vector.broadcast %c16_i32_35 : i32 to vector<256x128xi32>
    %84 = arith.cmpi slt, %80, %83 : vector<256x128xi32>
    %85 = arith.andi %82, %84 : vector<256x128xi1>
    %cst_36 = arith.constant 0.000000e+00 : f32
    %86 = vector.broadcast %cst_36 : f32 to vector<256x128xf32>
    %87 = arith.select %85, %28, %86 : vector<256x128xi1>, vector<256x128xf32>
    %88 = vector.shape_cast %87 : vector<256x128xf32> to vector<32x8x128xf32>
    %cst_37 = arith.constant dense<0.000000e+00> : vector<32x128xf32>
    %89 = vector.multi_reduction <add>, %88, %cst_37 [1] : vector<32x8x128xf32> to vector<32x128xf32>
    %c0_38 = arith.constant 0 : index
    %c0_39 = arith.constant 0 : index
    %90 = vector.load %arg7[%c0_38, %c0_39] : memref<32x128xf32, #tpu.memory_space<vmem>>, vector<32x128xf32>
    tpu.vector_store %arg7[%c0_38, %c0_39], %89 {strides = array<i32>} : memref<32x128xf32, #tpu.memory_space<vmem>>, vector<32x128xf32>,
    return
  }
  func.func @transform_0(%arg0: i32) -> (i32, i32) {
    %c0_i32 = arith.constant 0 : i32
    %c0_i32_0 = arith.constant 0 : i32
    return %arg0, %c0_i32 : i32, i32
  }
  func.func @transform_1(%arg0: i32) -> (i32, i32) {
    %c0_i32 = arith.constant 0 : i32
    %c0_i32_0 = arith.constant 0 : i32
    %c0_i32_1 = arith.constant 0 : i32
    return %c0_i32, %c0_i32_0 : i32, i32
  }
  func.func @transform_2(%arg0: i32) -> (i32, i32) {
    %c0_i32 = arith.constant 0 : i32
    %c0_i32_0 = arith.constant 0 : i32
    %c0_i32_1 = arith.constant 0 : i32
    return %c0_i32, %c0_i32_0 : i32, i32
  }
  func.func @transform_3(%arg0: i32) -> (i32, i32) {
    %c0_i32 = arith.constant 0 : i32
    %c0_i32_0 = arith.constant 0 : i32
    %c0_i32_1 = arith.constant 0 : i32
    return %c0_i32, %c0_i32_0 : i32, i32
  }
  func.func @transform_4(%arg0: i32) -> (i32, i32) {
    %c0_i32 = arith.constant 0 : i32
    %c0_i32_0 = arith.constant 0 : i32
    %c0_i32_1 = arith.constant 0 : i32
    return %c0_i32, %c0_i32_0 : i32, i32
  }
  func.func @transform_5(%arg0: i32) -> (i32, i32) {
    %c0_i32 = arith.constant 0 : i32
    %c0_i32_0 = arith.constant 0 : i32
    %c0_i32_1 = arith.constant 0 : i32
    return %c0_i32, %c0_i32_0 : i32, i32
  }
  func.func @transform_6(%arg0: i32) -> (i32, i32) {
    %c0_i32 = arith.constant 0 : i32
    %c0_i32_0 = arith.constant 0 : i32
    return %arg0, %c0_i32 : i32, i32
  }
  func.func @transform_7(%arg0: i32) -> (i32, i32) {
    %c0_i32 = arith.constant 0 : i32
    %c0_i32_0 = arith.constant 0 : i32
    return %arg0, %c0_i32 : i32, i32
  }
}

</mosaic_0001>

<llo_original>
// kernel: timeseries_autoencoder_forward.1
$region0: #{timeseries_autoencoder_forward.1}
  #allocation0 [shape = 'u32[]', space=smem, size = 0x4, offset = 0x4, fixed_abs, tag = 'smem constant byte address 0x4 - core index']
  #allocation1 [shape = 'u32[72,128]{1,0:T(1,128)}', space=vmem, size = 0x9000, scoped, tag = 'internal scratch']
  %s0 = inlined_call_operand.vmem [shape: bf16[256,16], index: 0, kind: input, shape index: {}]
  %s1 = inlined_call_operand.vmem [shape: bf16[16,64], index: 1, kind: input, shape index: {}]
  %s2 = inlined_call_operand.vmem [shape: bf16[64,256], index: 2, kind: input, shape index: {}]
  %s3 = inlined_call_operand.vmem [shape: bf16[32,64], index: 3, kind: input, shape index: {}]
  %s4 = inlined_call_operand.vmem [shape: bf16[64,128], index: 4, kind: input, shape index: {}]
  %s5 = inlined_call_operand.vmem [shape: f32[4,256], index: 5, kind: input, shape index: {}]
  %s6 = inlined_call_operand.vmem [shape: f32[32,128], index: 6, kind: output, shape index: {0}]
  %s7 = inlined_call_operand.vmem [shape: f32[32,256], index: 7, kind: output, shape index: {1}]
  %8 = xla_tuple %s6, %s7
  %s9 = sld [smem:[#allocation0]]
  $region42: #{timeseries_autoencoder_forward.1} parent=0
    _
  %s11 = ssub.s32 1, %s9
  %s12 = scalar_select 0, %s11, %s9
  // Predicated region
  $region2: #{timeseries_autoencoder_forward.1} parent=0 // pred_check
    _
  $region3: #{timeseries_autoencoder_forward.1} parent=0 // pred_check_branch
    %14 = sbr.rel (0) target = $region5
  $region4: #{timeseries_autoencoder_forward.1} parent=0 // pred_region
    _
  $region5: #{timeseries_autoencoder_forward.1} parent=0 // pred_fallthru
    _
  // Predicated region
  $region6: #{timeseries_autoencoder_forward.1} parent=0 // pred_check
    _
  $region7: #{timeseries_autoencoder_forward.1} parent=0 // pred_check_branch
    %16 = sbr.rel (0) target = $region9
  $region8: #{timeseries_autoencoder_forward.1} parent=0 // pred_region
    _
  $region9: #{timeseries_autoencoder_forward.1} parent=0 // pred_fallthru
    _
  // Predicated region
  $region10: #{timeseries_autoencoder_forward.1} parent=0 // pred_check
    _
  $region11: #{timeseries_autoencoder_forward.1} parent=0 // pred_check_branch
    %18 = sbr.rel (0) target = $region13
  $region12: #{timeseries_autoencoder_forward.1} parent=0 // pred_region
    _
  $region13: #{timeseries_autoencoder_forward.1} parent=0 // pred_fallthru
    _
  // Predicated region
  $region14: #{timeseries_autoencoder_forward.1} parent=0 // pred_check
    _
  $region15: #{timeseries_autoencoder_forward.1} parent=0 // pred_check_branch
    %20 = sbr.rel (0) target = $region17
  $region16: #{timeseries_autoencoder_forward.1} parent=0 // pred_region
    _
  $region17: #{timeseries_autoencoder_forward.1} parent=0 // pred_fallthru
    _
  // Predicated region
  $region18: #{timeseries_autoencoder_forward.1} parent=0 // pred_check
    _
  $region19: #{timeseries_autoencoder_forward.1} parent=0 // pred_check_branch
    %22 = sbr.rel (0) target = $region21
  $region20: #{timeseries_autoencoder_forward.1} parent=0 // pred_region
    _
  $region21: #{timeseries_autoencoder_forward.1} parent=0 // pred_fallthru
    _
  // Predicated region
  $region22: #{timeseries_autoencoder_forward.1} parent=0 // pred_check
    _
  $region23: #{timeseries_autoencoder_forward.1} parent=0 // pred_check_branch
    %24 = sbr.rel (0) target = $region25
  $region24: #{timeseries_autoencoder_forward.1} parent=0 // pred_region
    _
  $region25: #{timeseries_autoencoder_forward.1} parent=0 // pred_fallthru
    _
  %v26 = vld [vmem:[%s0] sm:$0xf]
  %v27 = vld [vmem:[%s0 + $0x4] sm:$0xf]
  %v28 = vld [vmem:[%s0 + $0x8] sm:$0xf]
  %v29 = vld [vmem:[%s0 + $0xc] sm:$0xf]
  %v30 = vld [vmem:[%s0 + $0x10] sm:$0xf]
  %v31 = vld [vmem:[%s0 + $0x14] sm:$0xf]
  %v32 = vld [vmem:[%s0 + $0x18] sm:$0xf]
  %v33 = vld [vmem:[%s0 + $0x1c] sm:$0xf]
  %v34 = vld [vmem:[%s0 + $0x20] sm:$0xf]
  %v35 = vld [vmem:[%s0 + $0x24] sm:$0xf]
  %v36 = vld [vmem:[%s0 + $0x28] sm:$0xf]
  %v37 = vld [vmem:[%s0 + $0x2c] sm:$0xf]
  %v38 = vld [vmem:[%s0 + $0x30] sm:$0xf]
  %v39 = vld [vmem:[%s0 + $0x34] sm:$0xf]
  %v40 = vld [vmem:[%s0 + $0x38] sm:$0xf]
  %v41 = vld [vmem:[%s0 + $0x3c] sm:$0xf]
  %v42 = vld [vmem:[%s0 + $0x40] sm:$0xf]
  %v43 = vld [vmem:[%s0 + $0x44] sm:$0xf]
  %v44 = vld [vmem:[%s0 + $0x48] sm:$0xf]
  %v45 = vld [vmem:[%s0 + $0x4c] sm:$0xf]
  %v46 = vld [vmem:[%s0 + $0x50] sm:$0xf]
  %v47 = vld [vmem:[%s0 + $0x54] sm:$0xf]
  %v48 = vld [vmem:[%s0 + $0x58] sm:$0xf]
  %v49 = vld [vmem:[%s0 + $0x5c] sm:$0xf]
  %v50 = vld [vmem:[%s0 + $0x60] sm:$0xf]
  %v51 = vld [vmem:[%s0 + $0x64] sm:$0xf]
  %v52 = vld [vmem:[%s0 + $0x68] sm:$0xf]
  %v53 = vld [vmem:[%s0 + $0x6c] sm:$0xf]
  %v54 = vld [vmem:[%s0 + $0x70] sm:$0xf]
  %v55 = vld [vmem:[%s0 + $0x74] sm:$0xf]
  %v56 = vld [vmem:[%s0 + $0x78] sm:$0xf]
  %v57 = vld [vmem:[%s0 + $0x7c] sm:$0xf]
  %v58 = vld [vmem:[%s5] sm:$0x1]
  %s59 = scalar_lea.vmem %s5, 1
  %v60 = vld [vmem:[%s59] ss:$4 sm:$0x3]
  %v61 = vld [vmem:[%s5 + $0x2] sm:$0x1]
  %v62 = vld [vmem:[%s5 + $0x3] sm:$0x1]
  %v63 = vld [vmem:[%s1] sm:$0xf]
  %v64 = vld [vmem:[%s1 + $0x4] sm:$0xf]
  %v65 = vperm.slane %v58, 0
  %v98 = vunpack.c.l.b16 %v26
  %v99 = vunpack.c.l.b16 %v27
  %v100 = vunpack.c.l.b16 %v28
  %v101 = vunpack.c.l.b16 %v29
  %v102 = vunpack.c.l.b16 %v30
  %v103 = vunpack.c.l.b16 %v31
  %v104 = vunpack.c.l.b16 %v32
  %v105 = vunpack.c.l.b16 %v33
  %v106 = vunpack.c.l.b16 %v34
  %v107 = vunpack.c.l.b16 %v35
  %v108 = vunpack.c.l.b16 %v36
  %v109 = vunpack.c.l.b16 %v37
  %v110 = vunpack.c.l.b16 %v38
  %v111 = vunpack.c.l.b16 %v39
  %v112 = vunpack.c.l.b16 %v40
  %v113 = vunpack.c.l.b16 %v41
  %v114 = vunpack.c.l.b16 %v42
  %v115 = vunpack.c.l.b16 %v43
  %v116 = vunpack.c.l.b16 %v44
  %v117 = vunpack.c.l.b16 %v45
  %v118 = vunpack.c.l.b16 %v46
  %v119 = vunpack.c.l.b16 %v47
  %v120 = vunpack.c.l.b16 %v48
  %v121 = vunpack.c.l.b16 %v49
  %v122 = vunpack.c.l.b16 %v50
  %v123 = vunpack.c.l.b16 %v51
  %v124 = vunpack.c.l.b16 %v52
  %v125 = vunpack.c.l.b16 %v53
  %v126 = vunpack.c.l.b16 %v54
  %v127 = vunpack.c.l.b16 %v55
  %v128 = vunpack.c.l.b16 %v56
  %v129 = vunpack.c.l.b16 %v57
  %v130 = vpack.c.b16 %v99, %v98
  %v131 = vpack.c.b16 %v101, %v100
  %v132 = vpack.c.b16 %v103, %v102
  %v133 = vpack.c.b16 %v105, %v104
  %v134 = vpack.c.b16 %v107, %v106
  %v135 = vpack.c.b16 %v109, %v108
  %v136 = vpack.c.b16 %v111, %v110
  %v137 = vpack.c.b16 %v113, %v112
  %v138 = vpack.c.b16 %v115, %v114
  %v139 = vpack.c.b16 %v117, %v116
  %v140 = vpack.c.b16 %v119, %v118
  %v141 = vpack.c.b16 %v121, %v120
  %v142 = vpack.c.b16 %v123, %v122
  %v143 = vpack.c.b16 %v125, %v124
  %v144 = vpack.c.b16 %v127, %v126
  %v145 = vpack.c.b16 %v129, %v128
  %v148 = vunpack.c.l.b16 %v63
  %v149 = vunpack.c.l.b16 %v64
  %v150 = vpack.c.b16 %v149, %v148
  %vm152 = vcmask 130048
  %v154 = vsel %vm152, %v130, 0
  %v157 = vsel %vm152, %v131, 0
  %v160 = vsel %vm152, %v132, 0
  %v163 = vsel %vm152, %v133, 0
  %v166 = vsel %vm152, %v134, 0
  %v169 = vsel %vm152, %v135, 0
  %v172 = vsel %vm152, %v136, 0
  %v175 = vsel %vm152, %v137, 0
  %v178 = vsel %vm152, %v138, 0
  %v181 = vsel %vm152, %v139, 0
  %v184 = vsel %vm152, %v140, 0
  %v187 = vsel %vm152, %v141, 0
  %v190 = vsel %vm152, %v142, 0
  %v193 = vsel %vm152, %v143, 0
  %v196 = vsel %vm152, %v144, 0
  %v199 = vsel %vm152, %v145, 0
  %201 = vmatpush.bf16.msra.mxu0 0
  %202 = vmatpush.bf16.msra.mxu0 0
  %203 = vmatpush.bf16.msra.mxu0 0
  %204 = vmatpush.bf16.msra.mxu0 0
  %205 = vmatpush.bf16.msra.mxu0 0
  %206 = vmatpush.bf16.msra.mxu0 0
  %207 = vmatpush.bf16.msra.mxu0 0
  %208 = vmatpush.bf16.msra.mxu0 %v150
  %209 = vmatmul.bf16.gmra.mxu0 %v154
  %v210 = vpop.f32.mrf.mxu0
  %v211 = vadd.f32 %v65, %v210
  %v212 = vpop.f32.mrf.mxu0
  %v213 = vadd.f32 %v65, %v212
  %214 = vmatmul.bf16.gmra.mxu0 %v157
  %v215 = vpop.f32.mrf.mxu0
  %v216 = vadd.f32 %v65, %v215
  %v217 = vpop.f32.mrf.mxu0
  %v218 = vadd.f32 %v65, %v217
  %219 = vmatmul.bf16.gmra.mxu0 %v160
  %v220 = vpop.f32.mrf.mxu0
  %v221 = vadd.f32 %v65, %v220
  %v222 = vpop.f32.mrf.mxu0
  %v223 = vadd.f32 %v65, %v222
  %224 = vmatmul.bf16.gmra.mxu0 %v163
  %v225 = vpop.f32.mrf.mxu0
  %v226 = vadd.f32 %v65, %v225
  %v227 = vpop.f32.mrf.mxu0
  %v228 = vadd.f32 %v65, %v227
  %229 = vmatmul.bf16.gmra.mxu0 %v166
  %v230 = vpop.f32.mrf.mxu0
  %v231 = vadd.f32 %v65, %v230
  %v232 = vpop.f32.mrf.mxu0
  %v233 = vadd.f32 %v65, %v232
  %234 = vmatmul.bf16.gmra.mxu0 %v169
  %v235 = vpop.f32.mrf.mxu0
  %v236 = vadd.f32 %v65, %v235
  %v237 = vpop.f32.mrf.mxu0
  %v238 = vadd.f32 %v65, %v237
  %239 = vmatmul.bf16.gmra.mxu0 %v172
  %v240 = vpop.f32.mrf.mxu0
  %v241 = vadd.f32 %v65, %v240
  %v242 = vpop.f32.mrf.mxu0
  %v243 = vadd.f32 %v65, %v242
  %244 = vmatmul.bf16.gmra.mxu0 %v175
  %v245 = vpop.f32.mrf.mxu0
  %v246 = vadd.f32 %v65, %v245
  %v247 = vpop.f32.mrf.mxu0
  %v248 = vadd.f32 %v65, %v247
  %249 = vmatmul.bf16.gmra.mxu0 %v178
  %v250 = vpop.f32.mrf.mxu0
  %v251 = vadd.f32 %v65, %v250
  %v252 = vpop.f32.mrf.mxu0
  %v253 = vadd.f32 %v65, %v252
  %254 = vmatmul.bf16.gmra.mxu0 %v181
  %v255 = vpop.f32.mrf.mxu0
  %v256 = vadd.f32 %v65, %v255
  %v257 = vpop.f32.mrf.mxu0
  %v258 = vadd.f32 %v65, %v257
  %259 = vmatmul.bf16.gmra.mxu0 %v184
  %v260 = vpop.f32.mrf.mxu0
  %v261 = vadd.f32 %v65, %v260
  %v262 = vpop.f32.mrf.mxu0
  %v263 = vadd.f32 %v65, %v262
  %264 = vmatmul.bf16.gmra.mxu0 %v187
  %v265 = vpop.f32.mrf.mxu0
  %v266 = vadd.f32 %v65, %v265
  %v267 = vpop.f32.mrf.mxu0
  %v268 = vadd.f32 %v65, %v267
  %269 = vmatmul.bf16.gmra.mxu0 %v190
  %v270 = vpop.f32.mrf.mxu0
  %v271 = vadd.f32 %v65, %v270
  %v272 = vpop.f32.mrf.mxu0
  %v273 = vadd.f32 %v65, %v272
  %274 = vmatmul.bf16.gmra.mxu0 %v193
  %v275 = vpop.f32.mrf.mxu0
  %v276 = vadd.f32 %v65, %v275
  %v277 = vpop.f32.mrf.mxu0
  %v278 = vadd.f32 %v65, %v277
  %279 = vmatmul.bf16.gmra.mxu0 %v196
  %v280 = vpop.f32.mrf.mxu0
  %v281 = vadd.f32 %v65, %v280
  %v282 = vpop.f32.mrf.mxu0
  %v283 = vadd.f32 %v65, %v282
  %284 = vmatmul.bf16.gmra.mxu0 %v199
  %v285 = vpop.f32.mrf.mxu0
  %v286 = vadd.f32 %v65, %v285
  %v287 = vpop.f32.mrf.mxu0
  %v288 = vadd.f32 %v65, %v287
  %289 = vdwg.mxu0
  %v290 = vmax.f32 %v211, 0.0
  %v291 = vmax.f32 %v213, 0.0
  %v292 = vmax.f32 %v216, 0.0
  %v293 = vmax.f32 %v218, 0.0
  %v294 = vmax.f32 %v221, 0.0
  %v295 = vmax.f32 %v223, 0.0
  %v296 = vmax.f32 %v226, 0.0
  %v297 = vmax.f32 %v228, 0.0
  %v298 = vmax.f32 %v231, 0.0
  %v299 = vmax.f32 %v233, 0.0
  %v300 = vmax.f32 %v236, 0.0
  %v301 = vmax.f32 %v238, 0.0
  %v302 = vmax.f32 %v241, 0.0
  %v303 = vmax.f32 %v243, 0.0
  %v304 = vmax.f32 %v246, 0.0
  %v305 = vmax.f32 %v248, 0.0
  %v306 = vmax.f32 %v251, 0.0
  %v307 = vmax.f32 %v253, 0.0
  %v308 = vmax.f32 %v256, 0.0
  %v309 = vmax.f32 %v258, 0.0
  %v310 = vmax.f32 %v261, 0.0
  %v311 = vmax.f32 %v263, 0.0
  %v312 = vmax.f32 %v266, 0.0
  %v313 = vmax.f32 %v268, 0.0
  %v314 = vmax.f32 %v271, 0.0
  %v315 = vmax.f32 %v273, 0.0
  %v316 = vmax.f32 %v276, 0.0
  %v317 = vmax.f32 %v278, 0.0
  %v318 = vmax.f32 %v281, 0.0
  %v319 = vmax.f32 %v283, 0.0
  %v320 = vmax.f32 %v286, 0.0
  %v321 = vmax.f32 %v288, 0.0
  %v322 = vpack.c.bf16 %v291, %v290
  %v323 = vpack.c.bf16 %v293, %v292
  %v324 = vpack.c.bf16 %v295, %v294
  %v325 = vpack.c.bf16 %v297, %v296
  %v326 = vpack.c.bf16 %v299, %v298
  %v327 = vpack.c.bf16 %v301, %v300
  %v328 = vpack.c.bf16 %v303, %v302
  %v329 = vpack.c.bf16 %v305, %v304
  %v330 = vpack.c.bf16 %v307, %v306
  %v331 = vpack.c.bf16 %v309, %v308
  %v332 = vpack.c.bf16 %v311, %v310
  %v333 = vpack.c.bf16 %v313, %v312
  %v334 = vpack.c.bf16 %v315, %v314
  %v335 = vpack.c.bf16 %v317, %v316
  %v336 = vpack.c.bf16 %v319, %v318
  %v337 = vpack.c.bf16 %v321, %v320
  %v338 = vld [vmem:[%s2] sm:$0xff]
  %v339 = vld [vmem:[%s2 + $0x8] sm:$0xff]
  %v340 = vld [vmem:[%s2 + $0x10] sm:$0xff]
  %v341 = vld [vmem:[%s2 + $0x18] sm:$0xff]
  %v342 = vld [vmem:[%s2 + $0x20] sm:$0xff]
  %v343 = vld [vmem:[%s2 + $0x28] sm:$0xff]
  %v344 = vld [vmem:[%s2 + $0x30] sm:$0xff]
  %v345 = vld [vmem:[%s2 + $0x38] sm:$0xff]
  %v347 = vperm.slane %v60, 0
  %v348 = vperm.slane %v60, 1
  %v359 = vunpack.c.l.b16 %v338
  %v360 = vunpack.c.h.b16 %v338
  %v361 = vunpack.c.l.b16 %v339
  %v362 = vunpack.c.h.b16 %v339
  %v363 = vunpack.c.l.b16 %v340
  %v364 = vunpack.c.h.b16 %v340
  %v365 = vunpack.c.l.b16 %v341
  %v366 = vunpack.c.h.b16 %v341
  %v367 = vunpack.c.l.b16 %v342
  %v368 = vunpack.c.h.b16 %v342
  %v369 = vunpack.c.l.b16 %v343
  %v370 = vunpack.c.h.b16 %v343
  %v371 = vunpack.c.l.b16 %v344
  %v372 = vunpack.c.h.b16 %v344
  %v373 = vunpack.c.l.b16 %v345
  %v374 = vunpack.c.h.b16 %v345
  %v375 = vpack.c.b16 %v361, %v359
  %v376 = vpack.c.b16 %v362, %v360
  %v377 = vpack.c.b16 %v365, %v363
  %v378 = vpack.c.b16 %v366, %v364
  %v379 = vpack.c.b16 %v369, %v367
  %v380 = vpack.c.b16 %v370, %v368
  %v381 = vpack.c.b16 %v373, %v371
  %v382 = vpack.c.b16 %v374, %v372
  %vm391 = vcmask 523264
  %v393 = vsel %vm391, %v322, 0
  %v396 = vsel %vm391, %v323, 0
  %v399 = vsel %vm391, %v324, 0
  %v402 = vsel %vm391, %v325, 0
  %v405 = vsel %vm391, %v326, 0
  %v408 = vsel %vm391, %v327, 0
  %v411 = vsel %vm391, %v328, 0
  %v414 = vsel %vm391, %v329, 0
  %v417 = vsel %vm391, %v330, 0
  %v420 = vsel %vm391, %v331, 0
  %v423 = vsel %vm391, %v332, 0
  %v426 = vsel %vm391, %v333, 0
  %v429 = vsel %vm391, %v334, 0
  %v432 = vsel %vm391, %v335, 0
  %v435 = vsel %vm391, %v336, 0
  %v438 = vsel %vm391, %v337, 0
  %440 = vmatpush.bf16.msra.mxu0 0
  %441 = vmatpush.bf16.msra.mxu0 0
  %442 = vmatpush.bf16.msra.mxu0 0
  %443 = vmatpush.bf16.msra.mxu0 0
  %444 = vmatpush.bf16.msra.mxu0 %v381
  %445 = vmatpush.bf16.msra.mxu0 %v379
  %446 = vmatpush.bf16.msra.mxu0 %v377
  %447 = vmatpush.bf16.msra.mxu0 %v375
  %448 = vmatmul.bf16.gmra.mxu0 %v393
  %v449 = vpop.f32.mrf.mxu0
  %v450 = vadd.f32 %v347, %v449
  %v451 = vpop.f32.mrf.mxu0
  %v452 = vadd.f32 %v347, %v451
  %453 = vmatmul.bf16.gmra.mxu0 %v396
  %v454 = vpop.f32.mrf.mxu0
  %v455 = vadd.f32 %v347, %v454
  %v456 = vpop.f32.mrf.mxu0
  %v457 = vadd.f32 %v347, %v456
  %458 = vmatmul.bf16.gmra.mxu0 %v399
  %v459 = vpop.f32.mrf.mxu0
  %v460 = vadd.f32 %v347, %v459
  %v461 = vpop.f32.mrf.mxu0
  %v462 = vadd.f32 %v347, %v461
  %463 = vmatmul.bf16.gmra.mxu0 %v402
  %v464 = vpop.f32.mrf.mxu0
  %v465 = vadd.f32 %v347, %v464
  %v466 = vpop.f32.mrf.mxu0
  %v467 = vadd.f32 %v347, %v466
  %468 = vmatmul.bf16.gmra.mxu0 %v405
  %v469 = vpop.f32.mrf.mxu0
  %v470 = vadd.f32 %v347, %v469
  %v471 = vpop.f32.mrf.mxu0
  %v472 = vadd.f32 %v347, %v471
  %473 = vmatmul.bf16.gmra.mxu0 %v408
  %v474 = vpop.f32.mrf.mxu0
  %v475 = vadd.f32 %v347, %v474
  %v476 = vpop.f32.mrf.mxu0
  %v477 = vadd.f32 %v347, %v476
  %478 = vmatmul.bf16.gmra.mxu0 %v411
  %v479 = vpop.f32.mrf.mxu0
  %v480 = vadd.f32 %v347, %v479
  %v481 = vpop.f32.mrf.mxu0
  %v482 = vadd.f32 %v347, %v481
  %483 = vmatmul.bf16.gmra.mxu0 %v414
  %v484 = vpop.f32.mrf.mxu0
  %v485 = vadd.f32 %v347, %v484
  %v486 = vpop.f32.mrf.mxu0
  %v487 = vadd.f32 %v347, %v486
  %488 = vmatmul.bf16.gmra.mxu0 %v417
  %v489 = vpop.f32.mrf.mxu0
  %v490 = vadd.f32 %v347, %v489
  %v491 = vpop.f32.mrf.mxu0
  %v492 = vadd.f32 %v347, %v491
  %493 = vmatmul.bf16.gmra.mxu0 %v420
  %v494 = vpop.f32.mrf.mxu0
  %v495 = vadd.f32 %v347, %v494
  %v496 = vpop.f32.mrf.mxu0
  %v497 = vadd.f32 %v347, %v496
  %498 = vmatmul.bf16.gmra.mxu0 %v423
  %v499 = vpop.f32.mrf.mxu0
  %v500 = vadd.f32 %v347, %v499
  %v501 = vpop.f32.mrf.mxu0
  %v502 = vadd.f32 %v347, %v501
  %503 = vmatmul.bf16.gmra.mxu0 %v426
  %v504 = vpop.f32.mrf.mxu0
  %v505 = vadd.f32 %v347, %v504
  %v506 = vpop.f32.mrf.mxu0
  %v507 = vadd.f32 %v347, %v506
  %508 = vmatmul.bf16.gmra.mxu0 %v429
  %v509 = vpop.f32.mrf.mxu0
  %v510 = vadd.f32 %v347, %v509
  %v511 = vpop.f32.mrf.mxu0
  %v512 = vadd.f32 %v347, %v511
  %513 = vmatmul.bf16.gmra.mxu0 %v432
  %v514 = vpop.f32.mrf.mxu0
  %v515 = vadd.f32 %v347, %v514
  %v516 = vpop.f32.mrf.mxu0
  %v517 = vadd.f32 %v347, %v516
  %518 = vmatmul.bf16.gmra.mxu0 %v435
  %v519 = vpop.f32.mrf.mxu0
  %v520 = vadd.f32 %v347, %v519
  %v521 = vpop.f32.mrf.mxu0
  %v522 = vadd.f32 %v347, %v521
  %523 = vmatmul.bf16.gmra.mxu0 %v438
  %v524 = vpop.f32.mrf.mxu0
  %v525 = vadd.f32 %v347, %v524
  %v526 = vpop.f32.mrf.mxu0
  %v527 = vadd.f32 %v347, %v526
  %528 = vdwg.mxu0
  %529 = vmatpush.bf16.msra.mxu0 0
  %530 = vmatpush.bf16.msra.mxu0 0
  %531 = vmatpush.bf16.msra.mxu0 0
  %532 = vmatpush.bf16.msra.mxu0 0
  %533 = vmatpush.bf16.msra.mxu0 %v382
  %534 = vmatpush.bf16.msra.mxu0 %v380
  %535 = vmatpush.bf16.msra.mxu0 %v378
  %536 = vmatpush.bf16.msra.mxu0 %v376
  %537 = vmatmul.bf16.gmra.mxu0 %v393
  %v538 = vpop.f32.mrf.mxu0
  %v539 = vadd.f32 %v348, %v538
  %v540 = vpop.f32.mrf.mxu0
  %v541 = vadd.f32 %v348, %v540
  %542 = vmatmul.bf16.gmra.mxu0 %v396
  %v543 = vpop.f32.mrf.mxu0
  %v544 = vadd.f32 %v348, %v543
  %v545 = vpop.f32.mrf.mxu0
  %v546 = vadd.f32 %v348, %v545
  %547 = vmatmul.bf16.gmra.mxu0 %v399
  %v548 = vpop.f32.mrf.mxu0
  %v549 = vadd.f32 %v348, %v548
  %v550 = vpop.f32.mrf.mxu0
  %v551 = vadd.f32 %v348, %v550
  %552 = vmatmul.bf16.gmra.mxu0 %v402
  %v553 = vpop.f32.mrf.mxu0
  %v554 = vadd.f32 %v348, %v553
  %v555 = vpop.f32.mrf.mxu0
  %v556 = vadd.f32 %v348, %v555
  %557 = vmatmul.bf16.gmra.mxu0 %v405
  %v558 = vpop.f32.mrf.mxu0
  %v559 = vadd.f32 %v348, %v558
  %v560 = vpop.f32.mrf.mxu0
  %v561 = vadd.f32 %v348, %v560
  %562 = vmatmul.bf16.gmra.mxu0 %v408
  %v563 = vpop.f32.mrf.mxu0
  %v564 = vadd.f32 %v348, %v563
  %v565 = vpop.f32.mrf.mxu0
  %v566 = vadd.f32 %v348, %v565
  %567 = vmatmul.bf16.gmra.mxu0 %v411
  %v568 = vpop.f32.mrf.mxu0
  %v569 = vadd.f32 %v348, %v568
  %v570 = vpop.f32.mrf.mxu0
  %v571 = vadd.f32 %v348, %v570
  %572 = vmatmul.bf16.gmra.mxu0 %v414
  %v573 = vpop.f32.mrf.mxu0
  %v574 = vadd.f32 %v348, %v573
  %v575 = vpop.f32.mrf.mxu0
  %v576 = vadd.f32 %v348, %v575
  %577 = vmatmul.bf16.gmra.mxu0 %v417
  %v578 = vpop.f32.mrf.mxu0
  %v579 = vadd.f32 %v348, %v578
  %v580 = vpop.f32.mrf.mxu0
  %v581 = vadd.f32 %v348, %v580
  %582 = vmatmul.bf16.gmra.mxu0 %v420
  %v583 = vpop.f32.mrf.mxu0
  %v584 = vadd.f32 %v348, %v583
  %v585 = vpop.f32.mrf.mxu0
  %v586 = vadd.f32 %v348, %v585
  %587 = vmatmul.bf16.gmra.mxu0 %v423
  %v588 = vpop.f32.mrf.mxu0
  %v589 = vadd.f32 %v348, %v588
  %v590 = vpop.f32.mrf.mxu0
  %v591 = vadd.f32 %v348, %v590
  %592 = vmatmul.bf16.gmra.mxu0 %v426
  %v593 = vpop.f32.mrf.mxu0
  %v594 = vadd.f32 %v348, %v593
  %v595 = vpop.f32.mrf.mxu0
  %v596 = vadd.f32 %v348, %v595
  %597 = vmatmul.bf16.gmra.mxu0 %v429
  %v598 = vpop.f32.mrf.mxu0
  %v599 = vadd.f32 %v348, %v598
  %v600 = vpop.f32.mrf.mxu0
  %v601 = vadd.f32 %v348, %v600
  %602 = vmatmul.bf16.gmra.mxu0 %v432
  %v603 = vpop.f32.mrf.mxu0
  %v604 = vadd.f32 %v348, %v603
  %v605 = vpop.f32.mrf.mxu0
  %v606 = vadd.f32 %v348, %v605
  %607 = vmatmul.bf16.gmra.mxu0 %v435
  %v608 = vpop.f32.mrf.mxu0
  %v609 = vadd.f32 %v348, %v608
  %v610 = vpop.f32.mrf.mxu0
  %v611 = vadd.f32 %v348, %v610
  %612 = vmatmul.bf16.gmra.mxu0 %v438
  %v613 = vpop.f32.mrf.mxu0
  %v614 = vadd.f32 %v348, %v613
  %v615 = vpop.f32.mrf.mxu0
  %v616 = vadd.f32 %v348, %v615
  %617 = vdwg.mxu0
  %v618 = vpack.c.bf16 %v452, %v450
  %v619 = vpack.c.bf16 %v457, %v455
  %v620 = vpack.c.bf16 %v462, %v460
  %v621 = vpack.c.bf16 %v467, %v465
  %v622 = vpack.c.bf16 %v472, %v470
  %v623 = vpack.c.bf16 %v477, %v475
  %v624 = vpack.c.bf16 %v482, %v480
  %v625 = vpack.c.bf16 %v487, %v485
  %v626 = vpack.c.bf16 %v492, %v490
  %v627 = vpack.c.bf16 %v497, %v495
  %v628 = vpack.c.bf16 %v502, %v500
  %v629 = vpack.c.bf16 %v507, %v505
  %v630 = vpack.c.bf16 %v512, %v510
  %v631 = vpack.c.bf16 %v517, %v515
  %v632 = vpack.c.bf16 %v522, %v520
  %v633 = vpack.c.bf16 %v527, %v525
  %v634 = vld [vmem:[%s3] sm:$0xf]
  %v635 = vld [vmem:[%s3 + $0x4] sm:$0xf]
  %v636 = vld [vmem:[%s3 + $0x8] sm:$0xf]
  %v637 = vld [vmem:[%s3 + $0xc] sm:$0xf]
  %v638 = vperm.slane %v61, 0
  %v643 = vunpack.c.l.b16 %v634
  %v644 = vunpack.c.l.b16 %v635
  %v645 = vunpack.c.l.b16 %v636
  %v646 = vunpack.c.l.b16 %v637
  %v647 = vpack.c.b16 %v644, %v643
  %v648 = vpack.c.b16 %v646, %v645
  %vm651 = vcmask 261120
  %v653 = vsel %vm651, %v618, 0
  %v656 = vsel %vm651, %v619, 0
  %v659 = vsel %vm651, %v620, 0
  %v662 = vsel %vm651, %v621, 0
  %v665 = vsel %vm651, %v622, 0
  %v668 = vsel %vm651, %v623, 0
  %v671 = vsel %vm651, %v624, 0
  %v674 = vsel %vm651, %v625, 0
  %v677 = vsel %vm651, %v626, 0
  %v680 = vsel %vm651, %v627, 0
  %v683 = vsel %vm651, %v628, 0
  %v686 = vsel %vm651, %v629, 0
  %v689 = vsel %vm651, %v630, 0
  %v692 = vsel %vm651, %v631, 0
  %v695 = vsel %vm651, %v632, 0
  %v698 = vsel %vm651, %v633, 0
  %700 = vmatpush.bf16.msra.mxu0 0
  %701 = vmatpush.bf16.msra.mxu0 0
  %702 = vmatpush.bf16.msra.mxu0 0
  %703 = vmatpush.bf16.msra.mxu0 0
  %704 = vmatpush.bf16.msra.mxu0 0
  %705 = vmatpush.bf16.msra.mxu0 0
  %706 = vmatpush.bf16.msra.mxu0 %v648
  %707 = vmatpush.bf16.msra.mxu0 %v647
  %708 = vmatmul.bf16.gmra.mxu0 %v653
  %v709 = vpop.f32.mrf.mxu0
  %v710 = vadd.f32 %v638, %v709
  %v711 = vpop.f32.mrf.mxu0
  %v712 = vadd.f32 %v638, %v711
  %713 = vmatmul.bf16.gmra.mxu0 %v656
  %v714 = vpop.f32.mrf.mxu0
  %v715 = vadd.f32 %v638, %v714
  %v716 = vpop.f32.mrf.mxu0
  %v717 = vadd.f32 %v638, %v716
  %718 = vmatmul.bf16.gmra.mxu0 %v659
  %v719 = vpop.f32.mrf.mxu0
  %v720 = vadd.f32 %v638, %v719
  %v721 = vpop.f32.mrf.mxu0
  %v722 = vadd.f32 %v638, %v721
  %723 = vmatmul.bf16.gmra.mxu0 %v662
  %v724 = vpop.f32.mrf.mxu0
  %v725 = vadd.f32 %v638, %v724
  %v726 = vpop.f32.mrf.mxu0
  %v727 = vadd.f32 %v638, %v726
  %728 = vmatmul.bf16.gmra.mxu0 %v665
  %v729 = vpop.f32.mrf.mxu0
  %v730 = vadd.f32 %v638, %v729
  %v731 = vpop.f32.mrf.mxu0
  %v732 = vadd.f32 %v638, %v731
  %733 = vmatmul.bf16.gmra.mxu0 %v668
  %v734 = vpop.f32.mrf.mxu0
  %v735 = vadd.f32 %v638, %v734
  %v736 = vpop.f32.mrf.mxu0
  %v737 = vadd.f32 %v638, %v736
  %738 = vmatmul.bf16.gmra.mxu0 %v671
  %v739 = vpop.f32.mrf.mxu0
  %v740 = vadd.f32 %v638, %v739
  %v741 = vpop.f32.mrf.mxu0
  %v742 = vadd.f32 %v638, %v741
  %743 = vmatmul.bf16.gmra.mxu0 %v674
  %v744 = vpop.f32.mrf.mxu0
  %v745 = vadd.f32 %v638, %v744
  %v746 = vpop.f32.mrf.mxu0
  %v747 = vadd.f32 %v638, %v746
  %748 = vmatmul.bf16.gmra.mxu0 %v677
  %v749 = vpop.f32.mrf.mxu0
  %v750 = vadd.f32 %v638, %v749
  %v751 = vpop.f32.mrf.mxu0
  %v752 = vadd.f32 %v638, %v751
  %753 = vmatmul.bf16.gmra.mxu0 %v680
  %v754 = vpop.f32.mrf.mxu0
  %v755 = vadd.f32 %v638, %v754
  %v756 = vpop.f32.mrf.mxu0
  %v757 = vadd.f32 %v638, %v756
  %758 = vmatmul.bf16.gmra.mxu0 %v683
  %v759 = vpop.f32.mrf.mxu0
  %v760 = vadd.f32 %v638, %v759
  %v761 = vpop.f32.mrf.mxu0
  %v762 = vadd.f32 %v638, %v761
  %763 = vmatmul.bf16.gmra.mxu0 %v686
  %v764 = vpop.f32.mrf.mxu0
  %v765 = vadd.f32 %v638, %v764
  %v766 = vpop.f32.mrf.mxu0
  %v767 = vadd.f32 %v638, %v766
  %768 = vmatmul.bf16.gmra.mxu0 %v689
  %v769 = vpop.f32.mrf.mxu0
  %v770 = vadd.f32 %v638, %v769
  %v771 = vpop.f32.mrf.mxu0
  %v772 = vadd.f32 %v638, %v771
  %773 = vmatmul.bf16.gmra.mxu0 %v692
  %v774 = vpop.f32.mrf.mxu0
  %v775 = vadd.f32 %v638, %v774
  %v776 = vpop.f32.mrf.mxu0
  %v777 = vadd.f32 %v638, %v776
  %778 = vmatmul.bf16.gmra.mxu0 %v695
  %v779 = vpop.f32.mrf.mxu0
  %v780 = vadd.f32 %v638, %v779
  %v781 = vpop.f32.mrf.mxu0
  %v782 = vadd.f32 %v638, %v781
  %783 = vmatmul.bf16.gmra.mxu0 %v698
  %v784 = vpop.f32.mrf.mxu0
  %v785 = vadd.f32 %v638, %v784
  %v786 = vpop.f32.mrf.mxu0
  %v787 = vadd.f32 %v638, %v786
  %788 = vdwg.mxu0
  %v789 = vmax.f32 %v710, 0.0
  %v790 = vmax.f32 %v712, 0.0
  %v791 = vmax.f32 %v715, 0.0
  %v792 = vmax.f32 %v717, 0.0
  %v793 = vmax.f32 %v720, 0.0
  %v794 = vmax.f32 %v722, 0.0
  %v795 = vmax.f32 %v725, 0.0
  %v796 = vmax.f32 %v727, 0.0
  %v797 = vmax.f32 %v730, 0.0
  %v798 = vmax.f32 %v732, 0.0
  %v799 = vmax.f32 %v735, 0.0
  %v800 = vmax.f32 %v737, 0.0
  %v801 = vmax.f32 %v740, 0.0
  %v802 = vmax.f32 %v742, 0.0
  %v803 = vmax.f32 %v745, 0.0
  %v804 = vmax.f32 %v747, 0.0
  %v805 = vmax.f32 %v750, 0.0
  %v806 = vmax.f32 %v752, 0.0
  %v807 = vmax.f32 %v755, 0.0
  %v808 = vmax.f32 %v757, 0.0
  %v809 = vmax.f32 %v760, 0.0
  %v810 = vmax.f32 %v762, 0.0
  %v811 = vmax.f32 %v765, 0.0
  %v812 = vmax.f32 %v767, 0.0
  %v813 = vmax.f32 %v770, 0.0
  %v814 = vmax.f32 %v772, 0.0
  %v815 = vmax.f32 %v775, 0.0
  %v816 = vmax.f32 %v777, 0.0
  %v817 = vmax.f32 %v780, 0.0
  %v818 = vmax.f32 %v782, 0.0
  %v819 = vmax.f32 %v785, 0.0
  %v820 = vmax.f32 %v787, 0.0
  %v821 = vpack.c.bf16 %v790, %v789
  %v822 = vpack.c.bf16 %v792, %v791
  %v823 = vpack.c.bf16 %v794, %v793
  %v824 = vpack.c.bf16 %v796, %v795
  %v825 = vpack.c.bf16 %v798, %v797
  %v826 = vpack.c.bf16 %v800, %v799
  %v827 = vpack.c.bf16 %v802, %v801
  %v828 = vpack.c.bf16 %v804, %v803
  %v829 = vpack.c.bf16 %v806, %v805
  %v830 = vpack.c.bf16 %v808, %v807
  %v831 = vpack.c.bf16 %v810, %v809
  %v832 = vpack.c.bf16 %v812, %v811
  %v833 = vpack.c.bf16 %v814, %v813
  %v834 = vpack.c.bf16 %v816, %v815
  %v835 = vpack.c.bf16 %v818, %v817
  %v836 = vpack.c.bf16 %v820, %v819
  %v837 = vld [vmem:[%s4] sm:$0xf]
  %v838 = vld [vmem:[%s4 + $0x4] sm:$0xf]
  %v839 = vld [vmem:[%s4 + $0x8] sm:$0xf]
  %v840 = vld [vmem:[%s4 + $0xc] sm:$0xf]
  %v841 = vld [vmem:[%s4 + $0x10] sm:$0xf]
  %v842 = vld [vmem:[%s4 + $0x14] sm:$0xf]
  %v843 = vld [vmem:[%s4 + $0x18] sm:$0xf]
  %v844 = vld [vmem:[%s4 + $0x1c] sm:$0xf]
  %v845 = vperm.slane %v62, 0
  %v854 = vunpack.c.l.b16 %v837
  %v855 = vunpack.c.l.b16 %v838
  %v856 = vunpack.c.l.b16 %v839
  %v857 = vunpack.c.l.b16 %v840
  %v858 = vunpack.c.l.b16 %v841
  %v859 = vunpack.c.l.b16 %v842
  %v860 = vunpack.c.l.b16 %v843
  %v861 = vunpack.c.l.b16 %v844
  %v862 = vpack.c.b16 %v855, %v854
  %v863 = vpack.c.b16 %v857, %v856
  %v864 = vpack.c.b16 %v859, %v858
  %v865 = vpack.c.b16 %v861, %v860
  %v871 = vsel %vm391, %v821, 0
  %v874 = vsel %vm391, %v822, 0
  %v877 = vsel %vm391, %v823, 0
  %v880 = vsel %vm391, %v824, 0
  %v883 = vsel %vm391, %v825, 0
  %v886 = vsel %vm391, %v826, 0
  %v889 = vsel %vm391, %v827, 0
  %v892 = vsel %vm391, %v828, 0
  %v895 = vsel %vm391, %v829, 0
  %v898 = vsel %vm391, %v830, 0
  %v901 = vsel %vm391, %v831, 0
  %v904 = vsel %vm391, %v832, 0
  %v907 = vsel %vm391, %v833, 0
  %v910 = vsel %vm391, %v834, 0
  %v913 = vsel %vm391, %v835, 0
  %v916 = vsel %vm391, %v836, 0
  %918 = vmatpush.bf16.msra.mxu0 0
  %919 = vmatpush.bf16.msra.mxu0 0
  %920 = vmatpush.bf16.msra.mxu0 0
  %921 = vmatpush.bf16.msra.mxu0 0
  %922 = vmatpush.bf16.msra.mxu0 %v865
  %923 = vmatpush.bf16.msra.mxu0 %v864
  %924 = vmatpush.bf16.msra.mxu0 %v863
  %925 = vmatpush.bf16.msra.mxu0 %v862
  %926 = vmatmul.bf16.gmra.mxu0 %v871
  %v927 = vpop.f32.mrf.mxu0
  %v928 = vadd.f32 %v845, %v927
  %v929 = vpop.f32.mrf.mxu0
  %v930 = vadd.f32 %v845, %v929
  %931 = vmatmul.bf16.gmra.mxu0 %v874
  %v932 = vpop.f32.mrf.mxu0
  %v933 = vadd.f32 %v845, %v932
  %v934 = vpop.f32.mrf.mxu0
  %v935 = vadd.f32 %v845, %v934
  %936 = vmatmul.bf16.gmra.mxu0 %v877
  %v937 = vpop.f32.mrf.mxu0
  %v938 = vadd.f32 %v845, %v937
  %v939 = vpop.f32.mrf.mxu0
  %v940 = vadd.f32 %v845, %v939
  %941 = vmatmul.bf16.gmra.mxu0 %v880
  %v942 = vpop.f32.mrf.mxu0
  %v943 = vadd.f32 %v845, %v942
  %v944 = vpop.f32.mrf.mxu0
  %v945 = vadd.f32 %v845, %v944
  %946 = vmatmul.bf16.gmra.mxu0 %v883
  %v947 = vpop.f32.mrf.mxu0
  %v948 = vadd.f32 %v845, %v947
  %v949 = vpop.f32.mrf.mxu0
  %v950 = vadd.f32 %v845, %v949
  %951 = vmatmul.bf16.gmra.mxu0 %v886
  %v952 = vpop.f32.mrf.mxu0
  %v953 = vadd.f32 %v845, %v952
  %v954 = vpop.f32.mrf.mxu0
  %v955 = vadd.f32 %v845, %v954
  %956 = vmatmul.bf16.gmra.mxu0 %v889
  %v957 = vpop.f32.mrf.mxu0
  %v958 = vadd.f32 %v845, %v957
  %v959 = vpop.f32.mrf.mxu0
  %v960 = vadd.f32 %v845, %v959
  %961 = vmatmul.bf16.gmra.mxu0 %v892
  %v962 = vpop.f32.mrf.mxu0
  %v963 = vadd.f32 %v845, %v962
  %v964 = vpop.f32.mrf.mxu0
  %v965 = vadd.f32 %v845, %v964
  %966 = vmatmul.bf16.gmra.mxu0 %v895
  %v967 = vpop.f32.mrf.mxu0
  %v968 = vadd.f32 %v845, %v967
  %v969 = vpop.f32.mrf.mxu0
  %v970 = vadd.f32 %v845, %v969
  %971 = vmatmul.bf16.gmra.mxu0 %v898
  %v972 = vpop.f32.mrf.mxu0
  %v973 = vadd.f32 %v845, %v972
  %v974 = vpop.f32.mrf.mxu0
  %v975 = vadd.f32 %v845, %v974
  %976 = vmatmul.bf16.gmra.mxu0 %v901
  %v977 = vpop.f32.mrf.mxu0
  %v978 = vadd.f32 %v845, %v977
  %v979 = vpop.f32.mrf.mxu0
  %v980 = vadd.f32 %v845, %v979
  %981 = vmatmul.bf16.gmra.mxu0 %v904
  %v982 = vpop.f32.mrf.mxu0
  %v983 = vadd.f32 %v845, %v982
  %v984 = vpop.f32.mrf.mxu0
  %v985 = vadd.f32 %v845, %v984
  %986 = vmatmul.bf16.gmra.mxu0 %v907
  %v987 = vpop.f32.mrf.mxu0
  %v988 = vadd.f32 %v845, %v987
  %v989 = vpop.f32.mrf.mxu0
  %v990 = vadd.f32 %v845, %v989
  %991 = vmatmul.bf16.gmra.mxu0 %v910
  %v992 = vpop.f32.mrf.mxu0
  %v993 = vadd.f32 %v845, %v992
  %v994 = vpop.f32.mrf.mxu0
  %v995 = vadd.f32 %v845, %v994
  %996 = vmatmul.bf16.gmra.mxu0 %v913
  %v997 = vpop.f32.mrf.mxu0
  %v998 = vadd.f32 %v845, %v997
  %v999 = vpop.f32.mrf.mxu0
  %v1000 = vadd.f32 %v845, %v999
  %1001 = vmatmul.bf16.gmra.mxu0 %v916
  %v1002 = vpop.f32.mrf.mxu0
  %v1003 = vadd.f32 %v845, %v1002
  %v1004 = vpop.f32.mrf.mxu0
  %v1005 = vadd.f32 %v845, %v1004
  %1006 = vdwg.mxu0
  %v1007 = vlaneseq
  %v1008 = vshrl.u32 %v1007, 7
  %v1009 = vadd.s32 %v1008, 8
  %v1010 = vadd.s32 %v1008, 16
  %v1011 = vadd.s32 %v1008, 24
  %v1012 = vadd.s32 %v1008, 32
  %v1013 = vadd.s32 %v1008, 40
  %v1014 = vadd.s32 %v1008, 48
  %v1015 = vadd.s32 %v1008, 56
  %v1016 = vadd.s32 %v1008, 64
  %v1017 = vadd.s32 %v1008, 72
  %v1018 = vadd.s32 %v1008, 80
  %v1019 = vadd.s32 %v1008, 88
  %v1020 = vadd.s32 %v1008, 96
  %v1021 = vadd.s32 %v1008, 104
  %v1022 = vadd.s32 %v1008, 112
  %v1023 = vadd.s32 %v1008, 120
  %v1024 = vadd.s32 %v1008, 128
  %v1025 = vadd.s32 %v1008, 136
  %v1026 = vadd.s32 %v1008, 144
  %v1027 = vadd.s32 %v1008, 152
  %v1028 = vadd.s32 %v1008, 160
  %v1029 = vadd.s32 %v1008, 168
  %v1030 = vadd.s32 %v1008, 176
  %v1031 = vadd.s32 %v1008, 184
  %v1032 = vadd.s32 %v1008, 192
  %v1033 = vadd.s32 %v1008, 200
  %v1034 = vadd.s32 %v1008, 208
  %v1035 = vadd.s32 %v1008, 216
  %v1036 = vadd.s32 %v1008, 224
  %v1037 = vadd.s32 %v1008, 232
  %v1038 = vadd.s32 %v1008, 240
  %v1039 = vadd.s32 %v1008, 248
  %vm1040 = vcmp.lt.s32.totalorder %v1008, 0
  %v1041 = vsub.s32 0, %v1008
  %v1042 = vsel %vm1040, %v1041, %v1008
  %v1043 = vshrl.u32 %v1042, 3
  %v1044 = vand.u32 %v1042, 7
  %v1045 = vsub.s32 0, %v1044
  %v1046 = vsel %vm1040, %v1045, %v1044
  %vm1047 = vcmp.lt.s32.totalorder %v1009, 0
  %v1048 = vsub.s32 0, %v1009
  %v1049 = vsel %vm1047, %v1048, %v1009
  %v1050 = vshrl.u32 %v1049, 3
  %v1051 = vand.u32 %v1049, 7
  %v1052 = vsub.s32 0, %v1051
  %v1053 = vsel %vm1047, %v1052, %v1051
  %vm1054 = vcmp.lt.s32.totalorder %v1010, 0
  %v1055 = vsub.s32 0, %v1010
  %v1056 = vsel %vm1054, %v1055, %v1010
  %v1057 = vshrl.u32 %v1056, 3
  %v1058 = vand.u32 %v1056, 7
  %v1059 = vsub.s32 0, %v1058
  %v1060 = vsel %vm1054, %v1059, %v1058
  %vm1061 = vcmp.lt.s32.totalorder %v1011, 0
  %v1062 = vsub.s32 0, %v1011
  %v1063 = vsel %vm1061, %v1062, %v1011
  %v1064 = vshrl.u32 %v1063, 3
  %v1065 = vand.u32 %v1063, 7
  %v1066 = vsub.s32 0, %v1065
  %v1067 = vsel %vm1061, %v1066, %v1065
  %vm1068 = vcmp.lt.s32.totalorder %v1012, 0
  %v1069 = vsub.s32 0, %v1012
  %v1070 = vsel %vm1068, %v1069, %v1012
  %v1071 = vshrl.u32 %v1070, 3
  %v1072 = vand.u32 %v1070, 7
  %v1073 = vsub.s32 0, %v1072
  %v1074 = vsel %vm1068, %v1073, %v1072
  %vm1075 = vcmp.lt.s32.totalorder %v1013, 0
  %v1076 = vsub.s32 0, %v1013
  %v1077 = vsel %vm1075, %v1076, %v1013
  %v1078 = vshrl.u32 %v1077, 3
  %v1079 = vand.u32 %v1077, 7
  %v1080 = vsub.s32 0, %v1079
  %v1081 = vsel %vm1075, %v1080, %v1079
  %vm1082 = vcmp.lt.s32.totalorder %v1014, 0
  %v1083 = vsub.s32 0, %v1014
  %v1084 = vsel %vm1082, %v1083, %v1014
  %v1085 = vshrl.u32 %v1084, 3
  %v1086 = vand.u32 %v1084, 7
  %v1087 = vsub.s32 0, %v1086
  %v1088 = vsel %vm1082, %v1087, %v1086
  %vm1089 = vcmp.lt.s32.totalorder %v1015, 0
  %v1090 = vsub.s32 0, %v1015
  %v1091 = vsel %vm1089, %v1090, %v1015
  %v1092 = vshrl.u32 %v1091, 3
  %v1093 = vand.u32 %v1091, 7
  %v1094 = vsub.s32 0, %v1093
  %v1095 = vsel %vm1089, %v1094, %v1093
  %vm1096 = vcmp.lt.s32.totalorder %v1016, 0
  %v1097 = vsub.s32 0, %v1016
  %v1098 = vsel %vm1096, %v1097, %v1016
  %v1099 = vshrl.u32 %v1098, 3
  %v1100 = vand.u32 %v1098, 7
  %v1101 = vsub.s32 0, %v1100
  %v1102 = vsel %vm1096, %v1101, %v1100
  %vm1103 = vcmp.lt.s32.totalorder %v1017, 0
  %v1104 = vsub.s32 0, %v1017
  %v1105 = vsel %vm1103, %v1104, %v1017
  %v1106 = vshrl.u32 %v1105, 3
  %v1107 = vand.u32 %v1105, 7
  %v1108 = vsub.s32 0, %v1107
  %v1109 = vsel %vm1103, %v1108, %v1107
  %vm1110 = vcmp.lt.s32.totalorder %v1018, 0
  %v1111 = vsub.s32 0, %v1018
  %v1112 = vsel %vm1110, %v1111, %v1018
  %v1113 = vshrl.u32 %v1112, 3
  %v1114 = vand.u32 %v1112, 7
  %v1115 = vsub.s32 0, %v1114
  %v1116 = vsel %vm1110, %v1115, %v1114
  %vm1117 = vcmp.lt.s32.totalorder %v1019, 0
  %v1118 = vsub.s32 0, %v1019
  %v1119 = vsel %vm1117, %v1118, %v1019
  %v1120 = vshrl.u32 %v1119, 3
  %v1121 = vand.u32 %v1119, 7
  %v1122 = vsub.s32 0, %v1121
  %v1123 = vsel %vm1117, %v1122, %v1121
  %vm1124 = vcmp.lt.s32.totalorder %v1020, 0
  %v1125 = vsub.s32 0, %v1020
  %v1126 = vsel %vm1124, %v1125, %v1020
  %v1127 = vshrl.u32 %v1126, 3
  %v1128 = vand.u32 %v1126, 7
  %v1129 = vsub.s32 0, %v1128
  %v1130 = vsel %vm1124, %v1129, %v1128
  %vm1131 = vcmp.lt.s32.totalorder %v1021, 0
  %v1132 = vsub.s32 0, %v1021
  %v1133 = vsel %vm1131, %v1132, %v1021
  %v1134 = vshrl.u32 %v1133, 3
  %v1135 = vand.u32 %v1133, 7
  %v1136 = vsub.s32 0, %v1135
  %v1137 = vsel %vm1131, %v1136, %v1135
  %vm1138 = vcmp.lt.s32.totalorder %v1022, 0
  %v1139 = vsub.s32 0, %v1022
  %v1140 = vsel %vm1138, %v1139, %v1022
  %v1141 = vshrl.u32 %v1140, 3
  %v1142 = vand.u32 %v1140, 7
  %v1143 = vsub.s32 0, %v1142
  %v1144 = vsel %vm1138, %v1143, %v1142
  %vm1145 = vcmp.lt.s32.totalorder %v1023, 0
  %v1146 = vsub.s32 0, %v1023
  %v1147 = vsel %vm1145, %v1146, %v1023
  %v1148 = vshrl.u32 %v1147, 3
  %v1149 = vand.u32 %v1147, 7
  %v1150 = vsub.s32 0, %v1149
  %v1151 = vsel %vm1145, %v1150, %v1149
  %vm1152 = vcmp.lt.s32.totalorder %v1024, 0
  %v1153 = vsub.s32 0, %v1024
  %v1154 = vsel %vm1152, %v1153, %v1024
  %v1155 = vshrl.u32 %v1154, 3
  %v1156 = vand.u32 %v1154, 7
  %v1157 = vsub.s32 0, %v1156
  %v1158 = vsel %vm1152, %v1157, %v1156
  %vm1159 = vcmp.lt.s32.totalorder %v1025, 0
  %v1160 = vsub.s32 0, %v1025
  %v1161 = vsel %vm1159, %v1160, %v1025
  %v1162 = vshrl.u32 %v1161, 3
  %v1163 = vand.u32 %v1161, 7
  %v1164 = vsub.s32 0, %v1163
  %v1165 = vsel %vm1159, %v1164, %v1163
  %vm1166 = vcmp.lt.s32.totalorder %v1026, 0
  %v1167 = vsub.s32 0, %v1026
  %v1168 = vsel %vm1166, %v1167, %v1026
  %v1169 = vshrl.u32 %v1168, 3
  %v1170 = vand.u32 %v1168, 7
  %v1171 = vsub.s32 0, %v1170
  %v1172 = vsel %vm1166, %v1171, %v1170
  %vm1173 = vcmp.lt.s32.totalorder %v1027, 0
  %v1174 = vsub.s32 0, %v1027
  %v1175 = vsel %vm1173, %v1174, %v1027
  %v1176 = vshrl.u32 %v1175, 3
  %v1177 = vand.u32 %v1175, 7
  %v1178 = vsub.s32 0, %v1177
  %v1179 = vsel %vm1173, %v1178, %v1177
  %vm1180 = vcmp.lt.s32.totalorder %v1028, 0
  %v1181 = vsub.s32 0, %v1028
  %v1182 = vsel %vm1180, %v1181, %v1028
  %v1183 = vshrl.u32 %v1182, 3
  %v1184 = vand.u32 %v1182, 7
  %v1185 = vsub.s32 0, %v1184
  %v1186 = vsel %vm1180, %v1185, %v1184
  %vm1187 = vcmp.lt.s32.totalorder %v1029, 0
  %v1188 = vsub.s32 0, %v1029
  %v1189 = vsel %vm1187, %v1188, %v1029
  %v1190 = vshrl.u32 %v1189, 3
  %v1191 = vand.u32 %v1189, 7
  %v1192 = vsub.s32 0, %v1191
  %v1193 = vsel %vm1187, %v1192, %v1191
  %vm1194 = vcmp.lt.s32.totalorder %v1030, 0
  %v1195 = vsub.s32 0, %v1030
  %v1196 = vsel %vm1194, %v1195, %v1030
  %v1197 = vshrl.u32 %v1196, 3
  %v1198 = vand.u32 %v1196, 7
  %v1199 = vsub.s32 0, %v1198
  %v1200 = vsel %vm1194, %v1199, %v1198
  %vm1201 = vcmp.lt.s32.totalorder %v1031, 0
  %v1202 = vsub.s32 0, %v1031
  %v1203 = vsel %vm1201, %v1202, %v1031
  %v1204 = vshrl.u32 %v1203, 3
  %v1205 = vand.u32 %v1203, 7
  %v1206 = vsub.s32 0, %v1205
  %v1207 = vsel %vm1201, %v1206, %v1205
  %vm1208 = vcmp.lt.s32.totalorder %v1032, 0
  %v1209 = vsub.s32 0, %v1032
  %v1210 = vsel %vm1208, %v1209, %v1032
  %v1211 = vshrl.u32 %v1210, 3
  %v1212 = vand.u32 %v1210, 7
  %v1213 = vsub.s32 0, %v1212
  %v1214 = vsel %vm1208, %v1213, %v1212
  %vm1215 = vcmp.lt.s32.totalorder %v1033, 0
  %v1216 = vsub.s32 0, %v1033
  %v1217 = vsel %vm1215, %v1216, %v1033
  %v1218 = vshrl.u32 %v1217, 3
  %v1219 = vand.u32 %v1217, 7
  %v1220 = vsub.s32 0, %v1219
  %v1221 = vsel %vm1215, %v1220, %v1219
  %vm1222 = vcmp.lt.s32.totalorder %v1034, 0
  %v1223 = vsub.s32 0, %v1034
  %v1224 = vsel %vm1222, %v1223, %v1034
  %v1225 = vshrl.u32 %v1224, 3
  %v1226 = vand.u32 %v1224, 7
  %v1227 = vsub.s32 0, %v1226
  %v1228 = vsel %vm1222, %v1227, %v1226
  %vm1229 = vcmp.lt.s32.totalorder %v1035, 0
  %v1230 = vsub.s32 0, %v1035
  %v1231 = vsel %vm1229, %v1230, %v1035
  %v1232 = vshrl.u32 %v1231, 3
  %v1233 = vand.u32 %v1231, 7
  %v1234 = vsub.s32 0, %v1233
  %v1235 = vsel %vm1229, %v1234, %v1233
  %vm1236 = vcmp.lt.s32.totalorder %v1036, 0
  %v1237 = vsub.s32 0, %v1036
  %v1238 = vsel %vm1236, %v1237, %v1036
  %v1239 = vshrl.u32 %v1238, 3
  %v1240 = vand.u32 %v1238, 7
  %v1241 = vsub.s32 0, %v1240
  %v1242 = vsel %vm1236, %v1241, %v1240
  %vm1243 = vcmp.lt.s32.totalorder %v1037, 0
  %v1244 = vsub.s32 0, %v1037
  %v1245 = vsel %vm1243, %v1244, %v1037
  %v1246 = vshrl.u32 %v1245, 3
  %v1247 = vand.u32 %v1245, 7
  %v1248 = vsub.s32 0, %v1247
  %v1249 = vsel %vm1243, %v1248, %v1247
  %vm1250 = vcmp.lt.s32.totalorder %v1038, 0
  %v1251 = vsub.s32 0, %v1038
  %v1252 = vsel %vm1250, %v1251, %v1038
  %v1253 = vshrl.u32 %v1252, 3
  %v1254 = vand.u32 %v1252, 7
  %v1255 = vsub.s32 0, %v1254
  %v1256 = vsel %vm1250, %v1255, %v1254
  %vm1257 = vcmp.lt.s32.totalorder %v1039, 0
  %v1258 = vsub.s32 0, %v1039
  %v1259 = vsel %vm1257, %v1258, %v1039
  %v1260 = vshrl.u32 %v1259, 3
  %v1261 = vand.u32 %v1259, 7
  %v1262 = vsub.s32 0, %v1261
  %v1263 = vsel %vm1257, %v1262, %v1261
  %vm1264 = vcmp.ne.s32.totalorder %v1046, 0
  %vm1265 = vcmp.ne.s32.totalorder %v1053, 0
  %vm1266 = vcmp.ne.s32.totalorder %v1060, 0
  %vm1267 = vcmp.ne.s32.totalorder %v1067, 0
  %vm1268 = vcmp.ne.s32.totalorder %v1074, 0
  %vm1269 = vcmp.ne.s32.totalorder %v1081, 0
  %vm1270 = vcmp.ne.s32.totalorder %v1088, 0
  %vm1271 = vcmp.ne.s32.totalorder %v1095, 0
  %vm1272 = vcmp.ne.s32.totalorder %v1102, 0
  %vm1273 = vcmp.ne.s32.totalorder %v1109, 0
  %vm1274 = vcmp.ne.s32.totalorder %v1116, 0
  %vm1275 = vcmp.ne.s32.totalorder %v1123, 0
  %vm1276 = vcmp.ne.s32.totalorder %v1130, 0
  %vm1277 = vcmp.ne.s32.totalorder %v1137, 0
  %vm1278 = vcmp.ne.s32.totalorder %v1144, 0
  %vm1279 = vcmp.ne.s32.totalorder %v1151, 0
  %vm1280 = vcmp.ne.s32.totalorder %v1158, 0
  %vm1281 = vcmp.ne.s32.totalorder %v1165, 0
  %vm1282 = vcmp.ne.s32.totalorder %v1172, 0
  %vm1283 = vcmp.ne.s32.totalorder %v1179, 0
  %vm1284 = vcmp.ne.s32.totalorder %v1186, 0
  %vm1285 = vcmp.ne.s32.totalorder %v1193, 0
  %vm1286 = vcmp.ne.s32.totalorder %v1200, 0
  %vm1287 = vcmp.ne.s32.totalorder %v1207, 0
  %vm1288 = vcmp.ne.s32.totalorder %v1214, 0
  %vm1289 = vcmp.ne.s32.totalorder %v1221, 0
  %vm1290 = vcmp.ne.s32.totalorder %v1228, 0
  %vm1291 = vcmp.ne.s32.totalorder %v1235, 0
  %vm1292 = vcmp.ne.s32.totalorder %v1242, 0
  %vm1293 = vcmp.ne.s32.totalorder %v1249, 0
  %vm1294 = vcmp.ne.s32.totalorder %v1256, 0
  %vm1295 = vcmp.ne.s32.totalorder %v1263, 0
  %vm1296 = vcmp.lt.s32.totalorder %v1046, 0
  %vm1297 = vcmp.lt.s32.totalorder %v1053, 0
  %vm1298 = vcmp.lt.s32.totalorder %v1060, 0
  %vm1299 = vcmp.lt.s32.totalorder %v1067, 0
  %vm1300 = vcmp.lt.s32.totalorder %v1074, 0
  %vm1301 = vcmp.lt.s32.totalorder %v1081, 0
  %vm1302 = vcmp.lt.s32.totalorder %v1088, 0
  %vm1303 = vcmp.lt.s32.totalorder %v1095, 0
  %vm1304 = vcmp.lt.s32.totalorder %v1102, 0
  %vm1305 = vcmp.lt.s32.totalorder %v1109, 0
  %vm1306 = vcmp.lt.s32.totalorder %v1116, 0
  %vm1307 = vcmp.lt.s32.totalorder %v1123, 0
  %vm1308 = vcmp.lt.s32.totalorder %v1130, 0
  %vm1309 = vcmp.lt.s32.totalorder %v1137, 0
  %vm1310 = vcmp.lt.s32.totalorder %v1144, 0
  %vm1311 = vcmp.lt.s32.totalorder %v1151, 0
  %vm1312 = vcmp.lt.s32.totalorder %v1158, 0
  %vm1313 = vcmp.lt.s32.totalorder %v1165, 0
  %vm1314 = vcmp.lt.s32.totalorder %v1172, 0
  %vm1315 = vcmp.lt.s32.totalorder %v1179, 0
  %vm1316 = vcmp.lt.s32.totalorder %v1186, 0
  %vm1317 = vcmp.lt.s32.totalorder %v1193, 0
  %vm1318 = vcmp.lt.s32.totalorder %v1200, 0
  %vm1319 = vcmp.lt.s32.totalorder %v1207, 0
  %vm1320 = vcmp.lt.s32.totalorder %v1214, 0
  %vm1321 = vcmp.lt.s32.totalorder %v1221, 0
  %vm1322 = vcmp.lt.s32.totalorder %v1228, 0
  %vm1323 = vcmp.lt.s32.totalorder %v1235, 0
  %vm1324 = vcmp.lt.s32.totalorder %v1242, 0
  %vm1325 = vcmp.lt.s32.totalorder %v1249, 0
  %vm1326 = vcmp.lt.s32.totalorder %v1256, 0
  %vm1327 = vcmp.lt.s32.totalorder %v1263, 0
  %vm1328 = vmand %vm1296, %vm1264
  %vm1329 = vmand %vm1297, %vm1265
  %vm1330 = vmand %vm1298, %vm1266
  %vm1331 = vmand %vm1299, %vm1267
  %vm1332 = vmand %vm1300, %vm1268
  %vm1333 = vmand %vm1301, %vm1269
  %vm1334 = vmand %vm1302, %vm1270
  %vm1335 = vmand %vm1303, %vm1271
  %vm1336 = vmand %vm1304, %vm1272
  %vm1337 = vmand %vm1305, %vm1273
  %vm1338 = vmand %vm1306, %vm1274
  %vm1339 = vmand %vm1307, %vm1275
  %vm1340 = vmand %vm1308, %vm1276
  %vm1341 = vmand %vm1309, %vm1277
  %vm1342 = vmand %vm1310, %vm1278
  %vm1343 = vmand %vm1311, %vm1279
  %vm1344 = vmand %vm1312, %vm1280
  %vm1345 = vmand %vm1313, %vm1281
  %vm1346 = vmand %vm1314, %vm1282
  %vm1347 = vmand %vm1315, %vm1283
  %vm1348 = vmand %vm1316, %vm1284
  %vm1349 = vmand %vm1317, %vm1285
  %vm1350 = vmand %vm1318, %vm1286
  %vm1351 = vmand %vm1319, %vm1287
  %vm1352 = vmand %vm1320, %vm1288
  %vm1353 = vmand %vm1321, %vm1289
  %vm1354 = vmand %vm1322, %vm1290
  %vm1355 = vmand %vm1323, %vm1291
  %vm1356 = vmand %vm1324, %vm1292
  %vm1357 = vmand %vm1325, %vm1293
  %vm1358 = vmand %vm1326, %vm1294
  %vm1359 = vmand %vm1327, %vm1295
  %v1360 = vadd.s32 %v1046, 8
  %v1361 = vadd.s32 %v1053, 8
  %v1362 = vadd.s32 %v1060, 8
  %v1363 = vadd.s32 %v1067, 8
  %v1364 = vadd.s32 %v1074, 8
  %v1365 = vadd.s32 %v1081, 8
  %v1366 = vadd.s32 %v1088, 8
  %v1367 = vadd.s32 %v1095, 8
  %v1368 = vadd.s32 %v1102, 8
  %v1369 = vadd.s32 %v1109, 8
  %v1370 = vadd.s32 %v1116, 8
  %v1371 = vadd.s32 %v1123, 8
  %v1372 = vadd.s32 %v1130, 8
  %v1373 = vadd.s32 %v1137, 8
  %v1374 = vadd.s32 %v1144, 8
  %v1375 = vadd.s32 %v1151, 8
  %v1376 = vadd.s32 %v1158, 8
  %v1377 = vadd.s32 %v1165, 8
  %v1378 = vadd.s32 %v1172, 8
  %v1379 = vadd.s32 %v1179, 8
  %v1380 = vadd.s32 %v1186, 8
  %v1381 = vadd.s32 %v1193, 8
  %v1382 = vadd.s32 %v1200, 8
  %v1383 = vadd.s32 %v1207, 8
  %v1384 = vadd.s32 %v1214, 8
  %v1385 = vadd.s32 %v1221, 8
  %v1386 = vadd.s32 %v1228, 8
  %v1387 = vadd.s32 %v1235, 8
  %v1388 = vadd.s32 %v1242, 8
  %v1389 = vadd.s32 %v1249, 8
  %v1390 = vadd.s32 %v1256, 8
  %v1391 = vadd.s32 %v1263, 8
  %v1392 = vsel %vm1328, %v1360, %v1046
  %v1393 = vsel %vm1329, %v1361, %v1053
  %v1394 = vsel %vm1330, %v1362, %v1060
  %v1395 = vsel %vm1331, %v1363, %v1067
  %v1396 = vsel %vm1332, %v1364, %v1074
  %v1397 = vsel %vm1333, %v1365, %v1081
  %v1398 = vsel %vm1334, %v1366, %v1088
  %v1399 = vsel %vm1335, %v1367, %v1095
  %v1400 = vsel %vm1336, %v1368, %v1102
  %v1401 = vsel %vm1337, %v1369, %v1109
  %v1402 = vsel %vm1338, %v1370, %v1116
  %v1403 = vsel %vm1339, %v1371, %v1123
  %v1404 = vsel %vm1340, %v1372, %v1130
  %v1405 = vsel %vm1341, %v1373, %v1137
  %v1406 = vsel %vm1342, %v1374, %v1144
  %v1407 = vsel %vm1343, %v1375, %v1151
  %v1408 = vsel %vm1344, %v1376, %v1158
  %v1409 = vsel %vm1345, %v1377, %v1165
  %v1410 = vsel %vm1346, %v1378, %v1172
  %v1411 = vsel %vm1347, %v1379, %v1179
  %v1412 = vsel %vm1348, %v1380, %v1186
  %v1413 = vsel %vm1349, %v1381, %v1193
  %v1414 = vsel %vm1350, %v1382, %v1200
  %v1415 = vsel %vm1351, %v1383, %v1207
  %v1416 = vsel %vm1352, %v1384, %v1214
  %v1417 = vsel %vm1353, %v1385, %v1221
  %v1418 = vsel %vm1354, %v1386, %v1228
  %v1419 = vsel %vm1355, %v1387, %v1235
  %v1420 = vsel %vm1356, %v1388, %v1242
  %v1421 = vsel %vm1357, %v1389, %v1249
  %v1422 = vsel %vm1358, %v1390, %v1256
  %v1423 = vsel %vm1359, %v1391, %v1263
  %v1424 = vlaneseq
  %v1425 = vand.u32 %v1424, 127
  %v1426 = vadd.s32 %v1425, 128
  %v1427 = vmul.u32 %v1392, 32
  %v1428 = vmul.u32 %v1393, 32
  %v1429 = vmul.u32 %v1394, 32
  %v1430 = vmul.u32 %v1395, 32
  %v1431 = vmul.u32 %v1396, 32
  %v1432 = vmul.u32 %v1397, 32
  %v1433 = vmul.u32 %v1398, 32
  %v1434 = vmul.u32 %v1399, 32
  %v1435 = vmul.u32 %v1400, 32
  %v1436 = vmul.u32 %v1401, 32
  %v1437 = vmul.u32 %v1402, 32
  %v1438 = vmul.u32 %v1403, 32
  %v1439 = vmul.u32 %v1404, 32
  %v1440 = vmul.u32 %v1405, 32
  %v1441 = vmul.u32 %v1406, 32
  %v1442 = vmul.u32 %v1407, 32
  %v1443 = vmul.u32 %v1408, 32
  %v1444 = vmul.u32 %v1409, 32
  %v1445 = vmul.u32 %v1410, 32
  %v1446 = vmul.u32 %v1411, 32
  %v1447 = vmul.u32 %v1412, 32
  %v1448 = vmul.u32 %v1413, 32
  %v1449 = vmul.u32 %v1414, 32
  %v1450 = vmul.u32 %v1415, 32
  %v1451 = vmul.u32 %v1416, 32
  %v1452 = vmul.u32 %v1417, 32
  %v1453 = vmul.u32 %v1418, 32
  %v1454 = vmul.u32 %v1419, 32
  %v1455 = vmul.u32 %v1420, 32
  %v1456 = vmul.u32 %v1421, 32
  %v1457 = vmul.u32 %v1422, 32
  %v1458 = vmul.u32 %v1423, 32
  %v1459 = vsub.s32 %v1425, %v1427
  %v1460 = vsub.s32 %v1426, %v1427
  %v1461 = vsub.s32 %v1425, %v1428
  %v1462 = vsub.s32 %v1426, %v1428
  %v1463 = vsub.s32 %v1425, %v1429
  %v1464 = vsub.s32 %v1426, %v1429
  %v1465 = vsub.s32 %v1425, %v1430
  %v1466 = vsub.s32 %v1426, %v1430
  %v1467 = vsub.s32 %v1425, %v1431
  %v1468 = vsub.s32 %v1426, %v1431
  %v1469 = vsub.s32 %v1425, %v1432
  %v1470 = vsub.s32 %v1426, %v1432
  %v1471 = vsub.s32 %v1425, %v1433
  %v1472 = vsub.s32 %v1426, %v1433
  %v1473 = vsub.s32 %v1425, %v1434
  %v1474 = vsub.s32 %v1426, %v1434
  %v1475 = vsub.s32 %v1425, %v1435
  %v1476 = vsub.s32 %v1426, %v1435
  %v1477 = vsub.s32 %v1425, %v1436
  %v1478 = vsub.s32 %v1426, %v1436
  %v1479 = vsub.s32 %v1425, %v1437
  %v1480 = vsub.s32 %v1426, %v1437
  %v1481 = vsub.s32 %v1425, %v1438
  %v1482 = vsub.s32 %v1426, %v1438
  %v1483 = vsub.s32 %v1425, %v1439
  %v1484 = vsub.s32 %v1426, %v1439
  %v1485 = vsub.s32 %v1425, %v1440
  %v1486 = vsub.s32 %v1426, %v1440
  %v1487 = vsub.s32 %v1425, %v1441
  %v1488 = vsub.s32 %v1426, %v1441
  %v1489 = vsub.s32 %v1425, %v1442
  %v1490 = vsub.s32 %v1426, %v1442
  %v1491 = vsub.s32 %v1425, %v1443
  %v1492 = vsub.s32 %v1426, %v1443
  %v1493 = vsub.s32 %v1425, %v1444
  %v1494 = vsub.s32 %v1426, %v1444
  %v1495 = vsub.s32 %v1425, %v1445
  %v1496 = vsub.s32 %v1426, %v1445
  %v1497 = vsub.s32 %v1425, %v1446
  %v1498 = vsub.s32 %v1426, %v1446
  %v1499 = vsub.s32 %v1425, %v1447
  %v1500 = vsub.s32 %v1426, %v1447
  %v1501 = vsub.s32 %v1425, %v1448
  %v1502 = vsub.s32 %v1426, %v1448
  %v1503 = vsub.s32 %v1425, %v1449
  %v1504 = vsub.s32 %v1426, %v1449
  %v1505 = vsub.s32 %v1425, %v1450
  %v1506 = vsub.s32 %v1426, %v1450
  %v1507 = vsub.s32 %v1425, %v1451
  %v1508 = vsub.s32 %v1426, %v1451
  %v1509 = vsub.s32 %v1425, %v1452
  %v1510 = vsub.s32 %v1426, %v1452
  %v1511 = vsub.s32 %v1425, %v1453
  %v1512 = vsub.s32 %v1426, %v1453
  %v1513 = vsub.s32 %v1425, %v1454
  %v1514 = vsub.s32 %v1426, %v1454
  %v1515 = vsub.s32 %v1425, %v1455
  %v1516 = vsub.s32 %v1426, %v1455
  %v1517 = vsub.s32 %v1425, %v1456
  %v1518 = vsub.s32 %v1426, %v1456
  %v1519 = vsub.s32 %v1425, %v1457
  %v1520 = vsub.s32 %v1426, %v1457
  %v1521 = vsub.s32 %v1425, %v1458
  %v1522 = vsub.s32 %v1426, %v1458
  %vm1523 = vcmp.ge.s32.totalorder %v1459, 0
  %vm1524 = vcmp.ge.s32.totalorder %v1460, 0
  %vm1525 = vcmp.ge.s32.totalorder %v1461, 0
  %vm1526 = vcmp.ge.s32.totalorder %v1462, 0
  %vm1527 = vcmp.ge.s32.totalorder %v1463, 0
  %vm1528 = vcmp.ge.s32.totalorder %v1464, 0
  %vm1529 = vcmp.ge.s32.totalorder %v1465, 0
  %vm1530 = vcmp.ge.s32.totalorder %v1466, 0
  %vm1531 = vcmp.ge.s32.totalorder %v1467, 0
  %vm1532 = vcmp.ge.s32.totalorder %v1468, 0
  %vm1533 = vcmp.ge.s32.totalorder %v1469, 0
  %vm1534 = vcmp.ge.s32.totalorder %v1470, 0
  %vm1535 = vcmp.ge.s32.totalorder %v1471, 0
  %vm1536 = vcmp.ge.s32.totalorder %v1472, 0
  %vm1537 = vcmp.ge.s32.totalorder %v1473, 0
  %vm1538 = vcmp.ge.s32.totalorder %v1474, 0
  %vm1539 = vcmp.ge.s32.totalorder %v1475, 0
  %vm1540 = vcmp.ge.s32.totalorder %v1476, 0
  %vm1541 = vcmp.ge.s32.totalorder %v1477, 0
  %vm1542 = vcmp.ge.s32.totalorder %v1478, 0
  %vm1543 = vcmp.ge.s32.totalorder %v1479, 0
  %vm1544 = vcmp.ge.s32.totalorder %v1480, 0
  %vm1545 = vcmp.ge.s32.totalorder %v1481, 0
  %vm1546 = vcmp.ge.s32.totalorder %v1482, 0
  %vm1547 = vcmp.ge.s32.totalorder %v1483, 0
  %vm1548 = vcmp.ge.s32.totalorder %v1484, 0
  %vm1549 = vcmp.ge.s32.totalorder %v1485, 0
  %vm1550 = vcmp.ge.s32.totalorder %v1486, 0
  %vm1551 = vcmp.ge.s32.totalorder %v1487, 0
  %vm1552 = vcmp.ge.s32.totalorder %v1488, 0
  %vm1553 = vcmp.ge.s32.totalorder %v1489, 0
  %vm1554 = vcmp.ge.s32.totalorder %v1490, 0
  %vm1555 = vcmp.ge.s32.totalorder %v1491, 0
  %vm1556 = vcmp.ge.s32.totalorder %v1492, 0
  %vm1557 = vcmp.ge.s32.totalorder %v1493, 0
  %vm1558 = vcmp.ge.s32.totalorder %v1494, 0
  %vm1559 = vcmp.ge.s32.totalorder %v1495, 0
  %vm1560 = vcmp.ge.s32.totalorder %v1496, 0
  %vm1561 = vcmp.ge.s32.totalorder %v1497, 0
  %vm1562 = vcmp.ge.s32.totalorder %v1498, 0
  %vm1563 = vcmp.ge.s32.totalorder %v1499, 0
  %vm1564 = vcmp.ge.s32.totalorder %v1500, 0
  %vm1565 = vcmp.ge.s32.totalorder %v1501, 0
  %vm1566 = vcmp.ge.s32.totalorder %v1502, 0
  %vm1567 = vcmp.ge.s32.totalorder %v1503, 0
  %vm1568 = vcmp.ge.s32.totalorder %v1504, 0
  %vm1569 = vcmp.ge.s32.totalorder %v1505, 0
  %vm1570 = vcmp.ge.s32.totalorder %v1506, 0
  %vm1571 = vcmp.ge.s32.totalorder %v1507, 0
  %vm1572 = vcmp.ge.s32.totalorder %v1508, 0
  %vm1573 = vcmp.ge.s32.totalorder %v1509, 0
  %vm1574 = vcmp.ge.s32.totalorder %v1510, 0
  %vm1575 = vcmp.ge.s32.totalorder %v1511, 0
  %vm1576 = vcmp.ge.s32.totalorder %v1512, 0
  %vm1577 = vcmp.ge.s32.totalorder %v1513, 0
  %vm1578 = vcmp.ge.s32.totalorder %v1514, 0
  %vm1579 = vcmp.ge.s32.totalorder %v1515, 0
  %vm1580 = vcmp.ge.s32.totalorder %v1516, 0
  %vm1581 = vcmp.ge.s32.totalorder %v1517, 0
  %vm1582 = vcmp.ge.s32.totalorder %v1518, 0
  %vm1583 = vcmp.ge.s32.totalorder %v1519, 0
  %vm1584 = vcmp.ge.s32.totalorder %v1520, 0
  %vm1585 = vcmp.ge.s32.totalorder %v1521, 0
  %vm1586 = vcmp.ge.s32.totalorder %v1522, 0
  %vm1587 = vcmp.lt.s32.totalorder %v1459, 32
  %vm1588 = vcmp.lt.s32.totalorder %v1460, 32
  %vm1589 = vcmp.lt.s32.totalorder %v1461, 32
  %vm1590 = vcmp.lt.s32.totalorder %v1462, 32
  %vm1591 = vcmp.lt.s32.totalorder %v1463, 32
  %vm1592 = vcmp.lt.s32.totalorder %v1464, 32
  %vm1593 = vcmp.lt.s32.totalorder %v1465, 32
  %vm1594 = vcmp.lt.s32.totalorder %v1466, 32
  %vm1595 = vcmp.lt.s32.totalorder %v1467, 32
  %vm1596 = vcmp.lt.s32.totalorder %v1468, 32
  %vm1597 = vcmp.lt.s32.totalorder %v1469, 32
  %vm1598 = vcmp.lt.s32.totalorder %v1470, 32
  %vm1599 = vcmp.lt.s32.totalorder %v1471, 32
  %vm1600 = vcmp.lt.s32.totalorder %v1472, 32
  %vm1601 = vcmp.lt.s32.totalorder %v1473, 32
  %vm1602 = vcmp.lt.s32.totalorder %v1474, 32
  %vm1603 = vcmp.lt.s32.totalorder %v1475, 32
  %vm1604 = vcmp.lt.s32.totalorder %v1476, 32
  %vm1605 = vcmp.lt.s32.totalorder %v1477, 32
  %vm1606 = vcmp.lt.s32.totalorder %v1478, 32
  %vm1607 = vcmp.lt.s32.totalorder %v1479, 32
  %vm1608 = vcmp.lt.s32.totalorder %v1480, 32
  %vm1609 = vcmp.lt.s32.totalorder %v1481, 32
  %vm1610 = vcmp.lt.s32.totalorder %v1482, 32
  %vm1611 = vcmp.lt.s32.totalorder %v1483, 32
  %vm1612 = vcmp.lt.s32.totalorder %v1484, 32
  %vm1613 = vcmp.lt.s32.totalorder %v1485, 32
  %vm1614 = vcmp.lt.s32.totalorder %v1486, 32
  %vm1615 = vcmp.lt.s32.totalorder %v1487, 32
  %vm1616 = vcmp.lt.s32.totalorder %v1488, 32
  %vm1617 = vcmp.lt.s32.totalorder %v1489, 32
  %vm1618 = vcmp.lt.s32.totalorder %v1490, 32
  %vm1619 = vcmp.lt.s32.totalorder %v1491, 32
  %vm1620 = vcmp.lt.s32.totalorder %v1492, 32
  %vm1621 = vcmp.lt.s32.totalorder %v1493, 32
  %vm1622 = vcmp.lt.s32.totalorder %v1494, 32
  %vm1623 = vcmp.lt.s32.totalorder %v1495, 32
  %vm1624 = vcmp.lt.s32.totalorder %v1496, 32
  %vm1625 = vcmp.lt.s32.totalorder %v1497, 32
  %vm1626 = vcmp.lt.s32.totalorder %v1498, 32
  %vm1627 = vcmp.lt.s32.totalorder %v1499, 32
  %vm1628 = vcmp.lt.s32.totalorder %v1500, 32
  %vm1629 = vcmp.lt.s32.totalorder %v1501, 32
  %vm1630 = vcmp.lt.s32.totalorder %v1502, 32
  %vm1631 = vcmp.lt.s32.totalorder %v1503, 32
  %vm1632 = vcmp.lt.s32.totalorder %v1504, 32
  %vm1633 = vcmp.lt.s32.totalorder %v1505, 32
  %vm1634 = vcmp.lt.s32.totalorder %v1506, 32
  %vm1635 = vcmp.lt.s32.totalorder %v1507, 32
  %vm1636 = vcmp.lt.s32.totalorder %v1508, 32
  %vm1637 = vcmp.lt.s32.totalorder %v1509, 32
  %vm1638 = vcmp.lt.s32.totalorder %v1510, 32
  %vm1639 = vcmp.lt.s32.totalorder %v1511, 32
  %vm1640 = vcmp.lt.s32.totalorder %v1512, 32
  %vm1641 = vcmp.lt.s32.totalorder %v1513, 32
  %vm1642 = vcmp.lt.s32.totalorder %v1514, 32
  %vm1643 = vcmp.lt.s32.totalorder %v1515, 32
  %vm1644 = vcmp.lt.s32.totalorder %v1516, 32
  %vm1645 = vcmp.lt.s32.totalorder %v1517, 32
  %vm1646 = vcmp.lt.s32.totalorder %v1518, 32
  %vm1647 = vcmp.lt.s32.totalorder %v1519, 32
  %vm1648 = vcmp.lt.s32.totalorder %v1520, 32
  %vm1649 = vcmp.lt.s32.totalorder %v1521, 32
  %vm1650 = vcmp.lt.s32.totalorder %v1522, 32
  %vm1651 = vmand %vm1523, %vm1587
  %vm1652 = vmand %vm1524, %vm1588
  %vm1653 = vmand %vm1525, %vm1589
  %vm1654 = vmand %vm1526, %vm1590
  %vm1655 = vmand %vm1527, %vm1591
  %vm1656 = vmand %vm1528, %vm1592
  %vm1657 = vmand %vm1529, %vm1593
  %vm1658 = vmand %vm1530, %vm1594
  %vm1659 = vmand %vm1531, %vm1595
  %vm1660 = vmand %vm1532, %vm1596
  %vm1661 = vmand %vm1533, %vm1597
  %vm1662 = vmand %vm1534, %vm1598
  %vm1663 = vmand %vm1535, %vm1599
  %vm1664 = vmand %vm1536, %vm1600
  %vm1665 = vmand %vm1537, %vm1601
  %vm1666 = vmand %vm1538, %vm1602
  %vm1667 = vmand %vm1539, %vm1603
  %vm1668 = vmand %vm1540, %vm1604
  %vm1669 = vmand %vm1541, %vm1605
  %vm1670 = vmand %vm1542, %vm1606
  %vm1671 = vmand %vm1543, %vm1607
  %vm1672 = vmand %vm1544, %vm1608
  %vm1673 = vmand %vm1545, %vm1609
  %vm1674 = vmand %vm1546, %vm1610
  %vm1675 = vmand %vm1547, %vm1611
  %vm1676 = vmand %vm1548, %vm1612
  %vm1677 = vmand %vm1549, %vm1613
  %vm1678 = vmand %vm1550, %vm1614
  %vm1679 = vmand %vm1551, %vm1615
  %vm1680 = vmand %vm1552, %vm1616
  %vm1681 = vmand %vm1553, %vm1617
  %vm1682 = vmand %vm1554, %vm1618
  %vm1683 = vmand %vm1555, %vm1619
  %vm1684 = vmand %vm1556, %vm1620
  %vm1685 = vmand %vm1557, %vm1621
  %vm1686 = vmand %vm1558, %vm1622
  %vm1687 = vmand %vm1559, %vm1623
  %vm1688 = vmand %vm1560, %vm1624
  %vm1689 = vmand %vm1561, %vm1625
  %vm1690 = vmand %vm1562, %vm1626
  %vm1691 = vmand %vm1563, %vm1627
  %vm1692 = vmand %vm1564, %vm1628
  %vm1693 = vmand %vm1565, %vm1629
  %vm1694 = vmand %vm1566, %vm1630
  %vm1695 = vmand %vm1567, %vm1631
  %vm1696 = vmand %vm1568, %vm1632
  %vm1697 = vmand %vm1569, %vm1633
  %vm1698 = vmand %vm1570, %vm1634
  %vm1699 = vmand %vm1571, %vm1635
  %vm1700 = vmand %vm1572, %vm1636
  %vm1701 = vmand %vm1573, %vm1637
  %vm1702 = vmand %vm1574, %vm1638
  %vm1703 = vmand %vm1575, %vm1639
  %vm1704 = vmand %vm1576, %vm1640
  %vm1705 = vmand %vm1577, %vm1641
  %vm1706 = vmand %vm1578, %vm1642
  %vm1707 = vmand %vm1579, %vm1643
  %vm1708 = vmand %vm1580, %vm1644
  %vm1709 = vmand %vm1581, %vm1645
  %vm1710 = vmand %vm1582, %vm1646
  %vm1711 = vmand %vm1583, %vm1647
  %vm1712 = vmand %vm1584, %vm1648
  %vm1713 = vmand %vm1585, %vm1649
  %vm1714 = vmand %vm1586, %vm1650
  %v1715 = vsel %vm1651, %v450, 0.0
  %v1716 = vsel %vm1652, %v539, 0.0
  %v1717 = vsel %vm1653, %v452, 0.0
  %v1718 = vsel %vm1654, %v541, 0.0
  %v1719 = vsel %vm1655, %v455, 0.0
  %v1720 = vsel %vm1656, %v544, 0.0
  %v1721 = vsel %vm1657, %v457, 0.0
  %v1722 = vsel %vm1658, %v546, 0.0
  %v1723 = vsel %vm1659, %v460, 0.0
  %v1724 = vsel %vm1660, %v549, 0.0
  %v1725 = vsel %vm1661, %v462, 0.0
  %v1726 = vsel %vm1662, %v551, 0.0
  %v1727 = vsel %vm1663, %v465, 0.0
  %v1728 = vsel %vm1664, %v554, 0.0
  %v1729 = vsel %vm1665, %v467, 0.0
  %v1730 = vsel %vm1666, %v556, 0.0
  %v1731 = vsel %vm1667, %v470, 0.0
  %v1732 = vsel %vm1668, %v559, 0.0
  %v1733 = vsel %vm1669, %v472, 0.0
  %v1734 = vsel %vm1670, %v561, 0.0
  %v1735 = vsel %vm1671, %v475, 0.0
  %v1736 = vsel %vm1672, %v564, 0.0
  %v1737 = vsel %vm1673, %v477, 0.0
  %v1738 = vsel %vm1674, %v566, 0.0
  %v1739 = vsel %vm1675, %v480, 0.0
  %v1740 = vsel %vm1676, %v569, 0.0
  %v1741 = vsel %vm1677, %v482, 0.0
  %v1742 = vsel %vm1678, %v571, 0.0
  %v1743 = vsel %vm1679, %v485, 0.0
  %v1744 = vsel %vm1680, %v574, 0.0
  %v1745 = vsel %vm1681, %v487, 0.0
  %v1746 = vsel %vm1682, %v576, 0.0
  %v1747 = vsel %vm1683, %v490, 0.0
  %v1748 = vsel %vm1684, %v579, 0.0
  %v1749 = vsel %vm1685, %v492, 0.0
  %v1750 = vsel %vm1686, %v581, 0.0
  %v1751 = vsel %vm1687, %v495, 0.0
  %v1752 = vsel %vm1688, %v584, 0.0
  %v1753 = vsel %vm1689, %v497, 0.0
  %v1754 = vsel %vm1690, %v586, 0.0
  %v1755 = vsel %vm1691, %v500, 0.0
  %v1756 = vsel %vm1692, %v589, 0.0
  %v1757 = vsel %vm1693, %v502, 0.0
  %v1758 = vsel %vm1694, %v591, 0.0
  %v1759 = vsel %vm1695, %v505, 0.0
  %v1760 = vsel %vm1696, %v594, 0.0
  %v1761 = vsel %vm1697, %v507, 0.0
  %v1762 = vsel %vm1698, %v596, 0.0
  %v1763 = vsel %vm1699, %v510, 0.0
  %v1764 = vsel %vm1700, %v599, 0.0
  %v1765 = vsel %vm1701, %v512, 0.0
  %v1766 = vsel %vm1702, %v601, 0.0
  %v1767 = vsel %vm1703, %v515, 0.0
  %v1768 = vsel %vm1704, %v604, 0.0
  %v1769 = vsel %vm1705, %v517, 0.0
  %v1770 = vsel %vm1706, %v606, 0.0
  %v1771 = vsel %vm1707, %v520, 0.0
  %v1772 = vsel %vm1708, %v609, 0.0
  %v1773 = vsel %vm1709, %v522, 0.0
  %v1774 = vsel %vm1710, %v611, 0.0
  %v1775 = vsel %vm1711, %v525, 0.0
  %v1776 = vsel %vm1712, %v614, 0.0
  %v1777 = vsel %vm1713, %v527, 0.0
  %v1778 = vsel %vm1714, %v616, 0.0
  %v1779 = vrot.slane %v1715, 4
  %v1780 = vadd.f32 %v1715, %v1779
  %v1781 = vrot.slane %v1780, 2
  %v1782 = vadd.f32 %v1780, %v1781
  %v1783 = vrot.slane %v1782, 1
  %v1784 = vadd.f32 %v1782, %v1783
  %v1785 = vrot.slane %v1716, 4
  %v1786 = vadd.f32 %v1716, %v1785
  %v1787 = vrot.slane %v1786, 2
  %v1788 = vadd.f32 %v1786, %v1787
  %v1789 = vrot.slane %v1788, 1
  %v1790 = vadd.f32 %v1788, %v1789
  %v1791 = vrot.slane %v1717, 4
  %v1792 = vadd.f32 %v1717, %v1791
  %v1793 = vrot.slane %v1792, 2
  %v1794 = vadd.f32 %v1792, %v1793
  %v1795 = vrot.slane %v1794, 1
  %v1796 = vadd.f32 %v1794, %v1795
  %v1797 = vrot.slane %v1718, 4
  %v1798 = vadd.f32 %v1718, %v1797
  %v1799 = vrot.slane %v1798, 2
  %v1800 = vadd.f32 %v1798, %v1799
  %v1801 = vrot.slane %v1800, 1
  %v1802 = vadd.f32 %v1800, %v1801
  %v1803 = vrot.slane %v1719, 4
  %v1804 = vadd.f32 %v1719, %v1803
  %v1805 = vrot.slane %v1804, 2
  %v1806 = vadd.f32 %v1804, %v1805
  %v1807 = vrot.slane %v1806, 1
  %v1808 = vadd.f32 %v1806, %v1807
  %v1809 = vrot.slane %v1720, 4
  %v1810 = vadd.f32 %v1720, %v1809
  %v1811 = vrot.slane %v1810, 2
  %v1812 = vadd.f32 %v1810, %v1811
  %v1813 = vrot.slane %v1812, 1
  %v1814 = vadd.f32 %v1812, %v1813
  %v1815 = vrot.slane %v1721, 4
  %v1816 = vadd.f32 %v1721, %v1815
  %v1817 = vrot.slane %v1816, 2
  %v1818 = vadd.f32 %v1816, %v1817
  %v1819 = vrot.slane %v1818, 1
  %v1820 = vadd.f32 %v1818, %v1819
  %v1821 = vrot.slane %v1722, 4
  %v1822 = vadd.f32 %v1722, %v1821
  %v1823 = vrot.slane %v1822, 2
  %v1824 = vadd.f32 %v1822, %v1823
  %v1825 = vrot.slane %v1824, 1
  %v1826 = vadd.f32 %v1824, %v1825
  %v1827 = vrot.slane %v1723, 4
  %v1828 = vadd.f32 %v1723, %v1827
  %v1829 = vrot.slane %v1828, 2
  %v1830 = vadd.f32 %v1828, %v1829
  %v1831 = vrot.slane %v1830, 1
  %v1832 = vadd.f32 %v1830, %v1831
  %v1833 = vrot.slane %v1724, 4
  %v1834 = vadd.f32 %v1724, %v1833
  %v1835 = vrot.slane %v1834, 2
  %v1836 = vadd.f32 %v1834, %v1835
  %v1837 = vrot.slane %v1836, 1
  %v1838 = vadd.f32 %v1836, %v1837
  %v1839 = vrot.slane %v1725, 4
  %v1840 = vadd.f32 %v1725, %v1839
  %v1841 = vrot.slane %v1840, 2
  %v1842 = vadd.f32 %v1840, %v1841
  %v1843 = vrot.slane %v1842, 1
  %v1844 = vadd.f32 %v1842, %v1843
  %v1845 = vrot.slane %v1726, 4
  %v1846 = vadd.f32 %v1726, %v1845
  %v1847 = vrot.slane %v1846, 2
  %v1848 = vadd.f32 %v1846, %v1847
  %v1849 = vrot.slane %v1848, 1
  %v1850 = vadd.f32 %v1848, %v1849
  %v1851 = vrot.slane %v1727, 4
  %v1852 = vadd.f32 %v1727, %v1851
  %v1853 = vrot.slane %v1852, 2
  %v1854 = vadd.f32 %v1852, %v1853
  %v1855 = vrot.slane %v1854, 1
  %v1856 = vadd.f32 %v1854, %v1855
  %v1857 = vrot.slane %v1728, 4
  %v1858 = vadd.f32 %v1728, %v1857
  %v1859 = vrot.slane %v1858, 2
  %v1860 = vadd.f32 %v1858, %v1859
  %v1861 = vrot.slane %v1860, 1
  %v1862 = vadd.f32 %v1860, %v1861
  %v1863 = vrot.slane %v1729, 4
  %v1864 = vadd.f32 %v1729, %v1863
  %v1865 = vrot.slane %v1864, 2
  %v1866 = vadd.f32 %v1864, %v1865
  %v1867 = vrot.slane %v1866, 1
  %v1868 = vadd.f32 %v1866, %v1867
  %v1869 = vrot.slane %v1730, 4
  %v1870 = vadd.f32 %v1730, %v1869
  %v1871 = vrot.slane %v1870, 2
  %v1872 = vadd.f32 %v1870, %v1871
  %v1873 = vrot.slane %v1872, 1
  %v1874 = vadd.f32 %v1872, %v1873
  %v1875 = vrot.slane %v1731, 4
  %v1876 = vadd.f32 %v1731, %v1875
  %v1877 = vrot.slane %v1876, 2
  %v1878 = vadd.f32 %v1876, %v1877
  %v1879 = vrot.slane %v1878, 1
  %v1880 = vadd.f32 %v1878, %v1879
  %v1881 = vrot.slane %v1732, 4
  %v1882 = vadd.f32 %v1732, %v1881
  %v1883 = vrot.slane %v1882, 2
  %v1884 = vadd.f32 %v1882, %v1883
  %v1885 = vrot.slane %v1884, 1
  %v1886 = vadd.f32 %v1884, %v1885
  %v1887 = vrot.slane %v1733, 4
  %v1888 = vadd.f32 %v1733, %v1887
  %v1889 = vrot.slane %v1888, 2
  %v1890 = vadd.f32 %v1888, %v1889
  %v1891 = vrot.slane %v1890, 1
  %v1892 = vadd.f32 %v1890, %v1891
  %v1893 = vrot.slane %v1734, 4
  %v1894 = vadd.f32 %v1734, %v1893
  %v1895 = vrot.slane %v1894, 2
  %v1896 = vadd.f32 %v1894, %v1895
  %v1897 = vrot.slane %v1896, 1
  %v1898 = vadd.f32 %v1896, %v1897
  %v1899 = vrot.slane %v1735, 4
  %v1900 = vadd.f32 %v1735, %v1899
  %v1901 = vrot.slane %v1900, 2
  %v1902 = vadd.f32 %v1900, %v1901
  %v1903 = vrot.slane %v1902, 1
  %v1904 = vadd.f32 %v1902, %v1903
  %v1905 = vrot.slane %v1736, 4
  %v1906 = vadd.f32 %v1736, %v1905
  %v1907 = vrot.slane %v1906, 2
  %v1908 = vadd.f32 %v1906, %v1907
  %v1909 = vrot.slane %v1908, 1
  %v1910 = vadd.f32 %v1908, %v1909
  %v1911 = vrot.slane %v1737, 4
  %v1912 = vadd.f32 %v1737, %v1911
  %v1913 = vrot.slane %v1912, 2
  %v1914 = vadd.f32 %v1912, %v1913
  %v1915 = vrot.slane %v1914, 1
  %v1916 = vadd.f32 %v1914, %v1915
  %v1917 = vrot.slane %v1738, 4
  %v1918 = vadd.f32 %v1738, %v1917
  %v1919 = vrot.slane %v1918, 2
  %v1920 = vadd.f32 %v1918, %v1919
  %v1921 = vrot.slane %v1920, 1
  %v1922 = vadd.f32 %v1920, %v1921
  %v1923 = vrot.slane %v1739, 4
  %v1924 = vadd.f32 %v1739, %v1923
  %v1925 = vrot.slane %v1924, 2
  %v1926 = vadd.f32 %v1924, %v1925
  %v1927 = vrot.slane %v1926, 1
  %v1928 = vadd.f32 %v1926, %v1927
  %v1929 = vrot.slane %v1740, 4
  %v1930 = vadd.f32 %v1740, %v1929
  %v1931 = vrot.slane %v1930, 2
  %v1932 = vadd.f32 %v1930, %v1931
  %v1933 = vrot.slane %v1932, 1
  %v1934 = vadd.f32 %v1932, %v1933
  %v1935 = vrot.slane %v1741, 4
  %v1936 = vadd.f32 %v1741, %v1935
  %v1937 = vrot.slane %v1936, 2
  %v1938 = vadd.f32 %v1936, %v1937
  %v1939 = vrot.slane %v1938, 1
  %v1940 = vadd.f32 %v1938, %v1939
  %v1941 = vrot.slane %v1742, 4
  %v1942 = vadd.f32 %v1742, %v1941
  %v1943 = vrot.slane %v1942, 2
  %v1944 = vadd.f32 %v1942, %v1943
  %v1945 = vrot.slane %v1944, 1
  %v1946 = vadd.f32 %v1944, %v1945
  %v1947 = vrot.slane %v1743, 4
  %v1948 = vadd.f32 %v1743, %v1947
  %v1949 = vrot.slane %v1948, 2
  %v1950 = vadd.f32 %v1948, %v1949
  %v1951 = vrot.slane %v1950, 1
  %v1952 = vadd.f32 %v1950, %v1951
  %v1953 = vrot.slane %v1744, 4
  %v1954 = vadd.f32 %v1744, %v1953
  %v1955 = vrot.slane %v1954, 2
  %v1956 = vadd.f32 %v1954, %v1955
  %v1957 = vrot.slane %v1956, 1
  %v1958 = vadd.f32 %v1956, %v1957
  %v1959 = vrot.slane %v1745, 4
  %v1960 = vadd.f32 %v1745, %v1959
  %v1961 = vrot.slane %v1960, 2
  %v1962 = vadd.f32 %v1960, %v1961
  %v1963 = vrot.slane %v1962, 1
  %v1964 = vadd.f32 %v1962, %v1963
  %v1965 = vrot.slane %v1746, 4
  %v1966 = vadd.f32 %v1746, %v1965
  %v1967 = vrot.slane %v1966, 2
  %v1968 = vadd.f32 %v1966, %v1967
  %v1969 = vrot.slane %v1968, 1
  %v1970 = vadd.f32 %v1968, %v1969
  %v1971 = vrot.slane %v1747, 4
  %v1972 = vadd.f32 %v1747, %v1971
  %v1973 = vrot.slane %v1972, 2
  %v1974 = vadd.f32 %v1972, %v1973
  %v1975 = vrot.slane %v1974, 1
  %v1976 = vadd.f32 %v1974, %v1975
  %v1977 = vrot.slane %v1748, 4
  %v1978 = vadd.f32 %v1748, %v1977
  %v1979 = vrot.slane %v1978, 2
  %v1980 = vadd.f32 %v1978, %v1979
  %v1981 = vrot.slane %v1980, 1
  %v1982 = vadd.f32 %v1980, %v1981
  %v1983 = vrot.slane %v1749, 4
  %v1984 = vadd.f32 %v1749, %v1983
  %v1985 = vrot.slane %v1984, 2
  %v1986 = vadd.f32 %v1984, %v1985
  %v1987 = vrot.slane %v1986, 1
  %v1988 = vadd.f32 %v1986, %v1987
  %v1989 = vrot.slane %v1750, 4
  %v1990 = vadd.f32 %v1750, %v1989
  %v1991 = vrot.slane %v1990, 2
  %v1992 = vadd.f32 %v1990, %v1991
  %v1993 = vrot.slane %v1992, 1
  %v1994 = vadd.f32 %v1992, %v1993
  %v1995 = vrot.slane %v1751, 4
  %v1996 = vadd.f32 %v1751, %v1995
  %v1997 = vrot.slane %v1996, 2
  %v1998 = vadd.f32 %v1996, %v1997
  %v1999 = vrot.slane %v1998, 1
  %v2000 = vadd.f32 %v1998, %v1999
  %v2001 = vrot.slane %v1752, 4
  %v2002 = vadd.f32 %v1752, %v2001
  %v2003 = vrot.slane %v2002, 2
  %v2004 = vadd.f32 %v2002, %v2003
  %v2005 = vrot.slane %v2004, 1
  %v2006 = vadd.f32 %v2004, %v2005
  %v2007 = vrot.slane %v1753, 4
  %v2008 = vadd.f32 %v1753, %v2007
  %v2009 = vrot.slane %v2008, 2
  %v2010 = vadd.f32 %v2008, %v2009
  %v2011 = vrot.slane %v2010, 1
  %v2012 = vadd.f32 %v2010, %v2011
  %v2013 = vrot.slane %v1754, 4
  %v2014 = vadd.f32 %v1754, %v2013
  %v2015 = vrot.slane %v2014, 2
  %v2016 = vadd.f32 %v2014, %v2015
  %v2017 = vrot.slane %v2016, 1
  %v2018 = vadd.f32 %v2016, %v2017
  %v2019 = vrot.slane %v1755, 4
  %v2020 = vadd.f32 %v1755, %v2019
  %v2021 = vrot.slane %v2020, 2
  %v2022 = vadd.f32 %v2020, %v2021
  %v2023 = vrot.slane %v2022, 1
  %v2024 = vadd.f32 %v2022, %v2023
  %v2025 = vrot.slane %v1756, 4
  %v2026 = vadd.f32 %v1756, %v2025
  %v2027 = vrot.slane %v2026, 2
  %v2028 = vadd.f32 %v2026, %v2027
  %v2029 = vrot.slane %v2028, 1
  %v2030 = vadd.f32 %v2028, %v2029
  %v2031 = vrot.slane %v1757, 4
  %v2032 = vadd.f32 %v1757, %v2031
  %v2033 = vrot.slane %v2032, 2
  %v2034 = vadd.f32 %v2032, %v2033
  %v2035 = vrot.slane %v2034, 1
  %v2036 = vadd.f32 %v2034, %v2035
  %v2037 = vrot.slane %v1758, 4
  %v2038 = vadd.f32 %v1758, %v2037
  %v2039 = vrot.slane %v2038, 2
  %v2040 = vadd.f32 %v2038, %v2039
  %v2041 = vrot.slane %v2040, 1
  %v2042 = vadd.f32 %v2040, %v2041
  %v2043 = vrot.slane %v1759, 4
  %v2044 = vadd.f32 %v1759, %v2043
  %v2045 = vrot.slane %v2044, 2
  %v2046 = vadd.f32 %v2044, %v2045
  %v2047 = vrot.slane %v2046, 1
  %v2048 = vadd.f32 %v2046, %v2047
  %v2049 = vrot.slane %v1760, 4
  %v2050 = vadd.f32 %v1760, %v2049
  %v2051 = vrot.slane %v2050, 2
  %v2052 = vadd.f32 %v2050, %v2051
  %v2053 = vrot.slane %v2052, 1
  %v2054 = vadd.f32 %v2052, %v2053
  %v2055 = vrot.slane %v1761, 4
  %v2056 = vadd.f32 %v1761, %v2055
  %v2057 = vrot.slane %v2056, 2
  %v2058 = vadd.f32 %v2056, %v2057
  %v2059 = vrot.slane %v2058, 1
  %v2060 = vadd.f32 %v2058, %v2059
  %v2061 = vrot.slane %v1762, 4
  %v2062 = vadd.f32 %v1762, %v2061
  %v2063 = vrot.slane %v2062, 2
  %v2064 = vadd.f32 %v2062, %v2063
  %v2065 = vrot.slane %v2064, 1
  %v2066 = vadd.f32 %v2064, %v2065
  %v2067 = vrot.slane %v1763, 4
  %v2068 = vadd.f32 %v1763, %v2067
  %v2069 = vrot.slane %v2068, 2
  %v2070 = vadd.f32 %v2068, %v2069
  %v2071 = vrot.slane %v2070, 1
  %v2072 = vadd.f32 %v2070, %v2071
  %v2073 = vrot.slane %v1764, 4
  %v2074 = vadd.f32 %v1764, %v2073
  %v2075 = vrot.slane %v2074, 2
  %v2076 = vadd.f32 %v2074, %v2075
  %v2077 = vrot.slane %v2076, 1
  %v2078 = vadd.f32 %v2076, %v2077
  %v2079 = vrot.slane %v1765, 4
  %v2080 = vadd.f32 %v1765, %v2079
  %v2081 = vrot.slane %v2080, 2
  %v2082 = vadd.f32 %v2080, %v2081
  %v2083 = vrot.slane %v2082, 1
  %v2084 = vadd.f32 %v2082, %v2083
  %v2085 = vrot.slane %v1766, 4
  %v2086 = vadd.f32 %v1766, %v2085
  %v2087 = vrot.slane %v2086, 2
  %v2088 = vadd.f32 %v2086, %v2087
  %v2089 = vrot.slane %v2088, 1
  %v2090 = vadd.f32 %v2088, %v2089
  %v2091 = vrot.slane %v1767, 4
  %v2092 = vadd.f32 %v1767, %v2091
  %v2093 = vrot.slane %v2092, 2
  %v2094 = vadd.f32 %v2092, %v2093
  %v2095 = vrot.slane %v2094, 1
  %v2096 = vadd.f32 %v2094, %v2095
  %v2097 = vrot.slane %v1768, 4
  %v2098 = vadd.f32 %v1768, %v2097
  %v2099 = vrot.slane %v2098, 2
  %v2100 = vadd.f32 %v2098, %v2099
  %v2101 = vrot.slane %v2100, 1
  %v2102 = vadd.f32 %v2100, %v2101
  %v2103 = vrot.slane %v1769, 4
  %v2104 = vadd.f32 %v1769, %v2103
  %v2105 = vrot.slane %v2104, 2
  %v2106 = vadd.f32 %v2104, %v2105
  %v2107 = vrot.slane %v2106, 1
  %v2108 = vadd.f32 %v2106, %v2107
  %v2109 = vrot.slane %v1770, 4
  %v2110 = vadd.f32 %v1770, %v2109
  %v2111 = vrot.slane %v2110, 2
  %v2112 = vadd.f32 %v2110, %v2111
  %v2113 = vrot.slane %v2112, 1
  %v2114 = vadd.f32 %v2112, %v2113
  %v2115 = vrot.slane %v1771, 4
  %v2116 = vadd.f32 %v1771, %v2115
  %v2117 = vrot.slane %v2116, 2
  %v2118 = vadd.f32 %v2116, %v2117
  %v2119 = vrot.slane %v2118, 1
  %v2120 = vadd.f32 %v2118, %v2119
  %v2121 = vrot.slane %v1772, 4
  %v2122 = vadd.f32 %v1772, %v2121
  %v2123 = vrot.slane %v2122, 2
  %v2124 = vadd.f32 %v2122, %v2123
  %v2125 = vrot.slane %v2124, 1
  %v2126 = vadd.f32 %v2124, %v2125
  %v2127 = vrot.slane %v1773, 4
  %v2128 = vadd.f32 %v1773, %v2127
  %v2129 = vrot.slane %v2128, 2
  %v2130 = vadd.f32 %v2128, %v2129
  %v2131 = vrot.slane %v2130, 1
  %v2132 = vadd.f32 %v2130, %v2131
  %v2133 = vrot.slane %v1774, 4
  %v2134 = vadd.f32 %v1774, %v2133
  %v2135 = vrot.slane %v2134, 2
  %v2136 = vadd.f32 %v2134, %v2135
  %v2137 = vrot.slane %v2136, 1
  %v2138 = vadd.f32 %v2136, %v2137
  %v2139 = vrot.slane %v1775, 4
  %v2140 = vadd.f32 %v1775, %v2139
  %v2141 = vrot.slane %v2140, 2
  %v2142 = vadd.f32 %v2140, %v2141
  %v2143 = vrot.slane %v2142, 1
  %v2144 = vadd.f32 %v2142, %v2143
  %v2145 = vrot.slane %v1776, 4
  %v2146 = vadd.f32 %v1776, %v2145
  %v2147 = vrot.slane %v2146, 2
  %v2148 = vadd.f32 %v2146, %v2147
  %v2149 = vrot.slane %v2148, 1
  %v2150 = vadd.f32 %v2148, %v2149
  %v2151 = vrot.slane %v1777, 4
  %v2152 = vadd.f32 %v1777, %v2151
  %v2153 = vrot.slane %v2152, 2
  %v2154 = vadd.f32 %v2152, %v2153
  %v2155 = vrot.slane %v2154, 1
  %v2156 = vadd.f32 %v2154, %v2155
  %v2157 = vrot.slane %v1778, 4
  %v2158 = vadd.f32 %v1778, %v2157
  %v2159 = vrot.slane %v2158, 2
  %v2160 = vadd.f32 %v2158, %v2159
  %v2161 = vrot.slane %v2160, 1
  %v2162 = vadd.f32 %v2160, %v2161
  %vm2227 = vcmask 1041409
  %v2228 = vsel %vm2227, %v1796, %v1784
  %vm2229 = vcmask 1042434
  %v2230 = vsel %vm2229, %v1808, %v2228
  %vm2231 = vcmask 1043459
  %v2232 = vsel %vm2231, %v1820, %v2230
  %vm2233 = vcmask 1044484
  %v2234 = vsel %vm2233, %v1832, %v2232
  %vm2235 = vcmask 1045509
  %v2236 = vsel %vm2235, %v1844, %v2234
  %vm2237 = vcmask 1046534
  %v2238 = vsel %vm2237, %v1856, %v2236
  %vm2239 = vcmask 1047559
  %v2240 = vsel %vm2239, %v1868, %v2238
  %v2241 = vsel %vm2227, %v1802, %v1790
  %v2242 = vsel %vm2229, %v1814, %v2241
  %v2243 = vsel %vm2231, %v1826, %v2242
  %v2244 = vsel %vm2233, %v1838, %v2243
  %v2245 = vsel %vm2235, %v1850, %v2244
  %v2246 = vsel %vm2237, %v1862, %v2245
  %v2247 = vsel %vm2239, %v1874, %v2246
  %v2248 = vsel %vm2227, %v1892, %v1880
  %v2249 = vsel %vm2229, %v1904, %v2248
  %v2250 = vsel %vm2231, %v1916, %v2249
  %v2251 = vsel %vm2233, %v1928, %v2250
  %v2252 = vsel %vm2235, %v1940, %v2251
  %v2253 = vsel %vm2237, %v1952, %v2252
  %v2254 = vsel %vm2239, %v1964, %v2253
  %v2255 = vsel %vm2227, %v1898, %v1886
  %v2256 = vsel %vm2229, %v1910, %v2255
  %v2257 = vsel %vm2231, %v1922, %v2256
  %v2258 = vsel %vm2233, %v1934, %v2257
  %v2259 = vsel %vm2235, %v1946, %v2258
  %v2260 = vsel %vm2237, %v1958, %v2259
  %v2261 = vsel %vm2239, %v1970, %v2260
  %v2262 = vsel %vm2227, %v1988, %v1976
  %v2263 = vsel %vm2229, %v2000, %v2262
  %v2264 = vsel %vm2231, %v2012, %v2263
  %v2265 = vsel %vm2233, %v2024, %v2264
  %v2266 = vsel %vm2235, %v2036, %v2265
  %v2267 = vsel %vm2237, %v2048, %v2266
  %v2268 = vsel %vm2239, %v2060, %v2267
  %v2269 = vsel %vm2227, %v1994, %v1982
  %v2270 = vsel %vm2229, %v2006, %v2269
  %v2271 = vsel %vm2231, %v2018, %v2270
  %v2272 = vsel %vm2233, %v2030, %v2271
  %v2273 = vsel %vm2235, %v2042, %v2272
  %v2274 = vsel %vm2237, %v2054, %v2273
  %v2275 = vsel %vm2239, %v2066, %v2274
  %v2276 = vsel %vm2227, %v2084, %v2072
  %v2277 = vsel %vm2229, %v2096, %v2276
  %v2278 = vsel %vm2231, %v2108, %v2277
  %v2279 = vsel %vm2233, %v2120, %v2278
  %v2280 = vsel %vm2235, %v2132, %v2279
  %v2281 = vsel %vm2237, %v2144, %v2280
  %v2282 = vsel %vm2239, %v2156, %v2281
  %v2283 = vsel %vm2227, %v2090, %v2078
  %v2284 = vsel %vm2229, %v2102, %v2283
  %v2285 = vsel %vm2231, %v2114, %v2284
  %v2286 = vsel %vm2233, %v2126, %v2285
  %v2287 = vsel %vm2235, %v2138, %v2286
  %v2288 = vsel %vm2237, %v2150, %v2287
  %v2289 = vsel %vm2239, %v2162, %v2288
  %2298 = vst [vmem:[%s7] sm:$0xff] %v2240
  %2299 = vst [vmem:[%s7 + $0x8] sm:$0xff] %v2247
  %2300 = vst [vmem:[%s7 + $0x10] sm:$0xff] %v2254
  %2301 = vst [vmem:[%s7 + $0x18] sm:$0xff] %v2261
  %2302 = vst [vmem:[%s7 + $0x20] sm:$0xff] %v2268
  %2303 = vst [vmem:[%s7 + $0x28] sm:$0xff] %v2275
  %2304 = vst [vmem:[%s7 + $0x30] sm:$0xff] %v2282
  %2305 = vst [vmem:[%s7 + $0x38] sm:$0xff] %v2289
  %v2306 = vmul.u32 %v1392, 16
  %v2307 = vmul.u32 %v1393, 16
  %v2308 = vmul.u32 %v1394, 16
  %v2309 = vmul.u32 %v1395, 16
  %v2310 = vmul.u32 %v1396, 16
  %v2311 = vmul.u32 %v1397, 16
  %v2312 = vmul.u32 %v1398, 16
  %v2313 = vmul.u32 %v1399, 16
  %v2314 = vmul.u32 %v1400, 16
  %v2315 = vmul.u32 %v1401, 16
  %v2316 = vmul.u32 %v1402, 16
  %v2317 = vmul.u32 %v1403, 16
  %v2318 = vmul.u32 %v1404, 16
  %v2319 = vmul.u32 %v1405, 16
  %v2320 = vmul.u32 %v1406, 16
  %v2321 = vmul.u32 %v1407, 16
  %v2322 = vmul.u32 %v1408, 16
  %v2323 = vmul.u32 %v1409, 16
  %v2324 = vmul.u32 %v1410, 16
  %v2325 = vmul.u32 %v1411, 16
  %v2326 = vmul.u32 %v1412, 16
  %v2327 = vmul.u32 %v1413, 16
  %v2328 = vmul.u32 %v1414, 16
  %v2329 = vmul.u32 %v1415, 16
  %v2330 = vmul.u32 %v1416, 16
  %v2331 = vmul.u32 %v1417, 16
  %v2332 = vmul.u32 %v1418, 16
  %v2333 = vmul.u32 %v1419, 16
  %v2334 = vmul.u32 %v1420, 16
  %v2335 = vmul.u32 %v1421, 16
  %v2336 = vmul.u32 %v1422, 16
  %v2337 = vmul.u32 %v1423, 16
  %v2338 = vsub.s32 %v1425, %v2306
  %v2339 = vsub.s32 %v1425, %v2307
  %v2340 = vsub.s32 %v1425, %v2308
  %v2341 = vsub.s32 %v1425, %v2309
  %v2342 = vsub.s32 %v1425, %v2310
  %v2343 = vsub.s32 %v1425, %v2311
  %v2344 = vsub.s32 %v1425, %v2312
  %v2345 = vsub.s32 %v1425, %v2313
  %v2346 = vsub.s32 %v1425, %v2314
  %v2347 = vsub.s32 %v1425, %v2315
  %v2348 = vsub.s32 %v1425, %v2316
  %v2349 = vsub.s32 %v1425, %v2317
  %v2350 = vsub.s32 %v1425, %v2318
  %v2351 = vsub.s32 %v1425, %v2319
  %v2352 = vsub.s32 %v1425, %v2320
  %v2353 = vsub.s32 %v1425, %v2321
  %v2354 = vsub.s32 %v1425, %v2322
  %v2355 = vsub.s32 %v1425, %v2323
  %v2356 = vsub.s32 %v1425, %v2324
  %v2357 = vsub.s32 %v1425, %v2325
  %v2358 = vsub.s32 %v1425, %v2326
  %v2359 = vsub.s32 %v1425, %v2327
  %v2360 = vsub.s32 %v1425, %v2328
  %v2361 = vsub.s32 %v1425, %v2329
  %v2362 = vsub.s32 %v1425, %v2330
  %v2363 = vsub.s32 %v1425, %v2331
  %v2364 = vsub.s32 %v1425, %v2332
  %v2365 = vsub.s32 %v1425, %v2333
  %v2366 = vsub.s32 %v1425, %v2334
  %v2367 = vsub.s32 %v1425, %v2335
  %v2368 = vsub.s32 %v1425, %v2336
  %v2369 = vsub.s32 %v1425, %v2337
  %vm2370 = vcmp.ge.s32.totalorder %v2338, 0
  %vm2371 = vcmp.ge.s32.totalorder %v2339, 0
  %vm2372 = vcmp.ge.s32.totalorder %v2340, 0
  %vm2373 = vcmp.ge.s32.totalorder %v2341, 0
  %vm2374 = vcmp.ge.s32.totalorder %v2342, 0
  %vm2375 = vcmp.ge.s32.totalorder %v2343, 0
  %vm2376 = vcmp.ge.s32.totalorder %v2344, 0
  %vm2377 = vcmp.ge.s32.totalorder %v2345, 0
  %vm2378 = vcmp.ge.s32.totalorder %v2346, 0
  %vm2379 = vcmp.ge.s32.totalorder %v2347, 0
  %vm2380 = vcmp.ge.s32.totalorder %v2348, 0
  %vm2381 = vcmp.ge.s32.totalorder %v2349, 0
  %vm2382 = vcmp.ge.s32.totalorder %v2350, 0
  %vm2383 = vcmp.ge.s32.totalorder %v2351, 0
  %vm2384 = vcmp.ge.s32.totalorder %v2352, 0
  %vm2385 = vcmp.ge.s32.totalorder %v2353, 0
  %vm2386 = vcmp.ge.s32.totalorder %v2354, 0
  %vm2387 = vcmp.ge.s32.totalorder %v2355, 0
  %vm2388 = vcmp.ge.s32.totalorder %v2356, 0
  %vm2389 = vcmp.ge.s32.totalorder %v2357, 0
  %vm2390 = vcmp.ge.s32.totalorder %v2358, 0
  %vm2391 = vcmp.ge.s32.totalorder %v2359, 0
  %vm2392 = vcmp.ge.s32.totalorder %v2360, 0
  %vm2393 = vcmp.ge.s32.totalorder %v2361, 0
  %vm2394 = vcmp.ge.s32.totalorder %v2362, 0
  %vm2395 = vcmp.ge.s32.totalorder %v2363, 0
  %vm2396 = vcmp.ge.s32.totalorder %v2364, 0
  %vm2397 = vcmp.ge.s32.totalorder %v2365, 0
  %vm2398 = vcmp.ge.s32.totalorder %v2366, 0
  %vm2399 = vcmp.ge.s32.totalorder %v2367, 0
  %vm2400 = vcmp.ge.s32.totalorder %v2368, 0
  %vm2401 = vcmp.ge.s32.totalorder %v2369, 0
  %vm2402 = vcmp.lt.s32.totalorder %v2338, 16
  %vm2403 = vcmp.lt.s32.totalorder %v2339, 16
  %vm2404 = vcmp.lt.s32.totalorder %v2340, 16
  %vm2405 = vcmp.lt.s32.totalorder %v2341, 16
  %vm2406 = vcmp.lt.s32.totalorder %v2342, 16
  %vm2407 = vcmp.lt.s32.totalorder %v2343, 16
  %vm2408 = vcmp.lt.s32.totalorder %v2344, 16
  %vm2409 = vcmp.lt.s32.totalorder %v2345, 16
  %vm2410 = vcmp.lt.s32.totalorder %v2346, 16
  %vm2411 = vcmp.lt.s32.totalorder %v2347, 16
  %vm2412 = vcmp.lt.s32.totalorder %v2348, 16
  %vm2413 = vcmp.lt.s32.totalorder %v2349, 16
  %vm2414 = vcmp.lt.s32.totalorder %v2350, 16
  %vm2415 = vcmp.lt.s32.totalorder %v2351, 16
  %vm2416 = vcmp.lt.s32.totalorder %v2352, 16
  %vm2417 = vcmp.lt.s32.totalorder %v2353, 16
  %vm2418 = vcmp.lt.s32.totalorder %v2354, 16
  %vm2419 = vcmp.lt.s32.totalorder %v2355, 16
  %vm2420 = vcmp.lt.s32.totalorder %v2356, 16
  %vm2421 = vcmp.lt.s32.totalorder %v2357, 16
  %vm2422 = vcmp.lt.s32.totalorder %v2358, 16
  %vm2423 = vcmp.lt.s32.totalorder %v2359, 16
  %vm2424 = vcmp.lt.s32.totalorder %v2360, 16
  %vm2425 = vcmp.lt.s32.totalorder %v2361, 16
  %vm2426 = vcmp.lt.s32.totalorder %v2362, 16
  %vm2427 = vcmp.lt.s32.totalorder %v2363, 16
  %vm2428 = vcmp.lt.s32.totalorder %v2364, 16
  %vm2429 = vcmp.lt.s32.totalorder %v2365, 16
  %vm2430 = vcmp.lt.s32.totalorder %v2366, 16
  %vm2431 = vcmp.lt.s32.totalorder %v2367, 16
  %vm2432 = vcmp.lt.s32.totalorder %v2368, 16
  %vm2433 = vcmp.lt.s32.totalorder %v2369, 16
  %vm2434 = vmand %vm2370, %vm2402
  %vm2435 = vmand %vm2371, %vm2403
  %vm2436 = vmand %vm2372, %vm2404
  %vm2437 = vmand %vm2373, %vm2405
  %vm2438 = vmand %vm2374, %vm2406
  %vm2439 = vmand %vm2375, %vm2407
  %vm2440 = vmand %vm2376, %vm2408
  %vm2441 = vmand %vm2377, %vm2409
  %vm2442 = vmand %vm2378, %vm2410
  %vm2443 = vmand %vm2379, %vm2411
  %vm2444 = vmand %vm2380, %vm2412
  %vm2445 = vmand %vm2381, %vm2413
  %vm2446 = vmand %vm2382, %vm2414
  %vm2447 = vmand %vm2383, %vm2415
  %vm2448 = vmand %vm2384, %vm2416
  %vm2449 = vmand %vm2385, %vm2417
  %vm2450 = vmand %vm2386, %vm2418
  %vm2451 = vmand %vm2387, %vm2419
  %vm2452 = vmand %vm2388, %vm2420
  %vm2453 = vmand %vm2389, %vm2421
  %vm2454 = vmand %vm2390, %vm2422
  %vm2455 = vmand %vm2391, %vm2423
  %vm2456 = vmand %vm2392, %vm2424
  %vm2457 = vmand %vm2393, %vm2425
  %vm2458 = vmand %vm2394, %vm2426
  %vm2459 = vmand %vm2395, %vm2427
  %vm2460 = vmand %vm2396, %vm2428
  %vm2461 = vmand %vm2397, %vm2429
  %vm2462 = vmand %vm2398, %vm2430
  %vm2463 = vmand %vm2399, %vm2431
  %vm2464 = vmand %vm2400, %vm2432
  %vm2465 = vmand %vm2401, %vm2433
  %v2466 = vsel %vm2434, %v928, 0.0
  %v2467 = vsel %vm2435, %v930, 0.0
  %v2468 = vsel %vm2436, %v933, 0.0
  %v2469 = vsel %vm2437, %v935, 0.0
  %v2470 = vsel %vm2438, %v938, 0.0
  %v2471 = vsel %vm2439, %v940, 0.0
  %v2472 = vsel %vm2440, %v943, 0.0
  %v2473 = vsel %vm2441, %v945, 0.0
  %v2474 = vsel %vm2442, %v948, 0.0
  %v2475 = vsel %vm2443, %v950, 0.0
  %v2476 = vsel %vm2444, %v953, 0.0
  %v2477 = vsel %vm2445, %v955, 0.0
  %v2478 = vsel %vm2446, %v958, 0.0
  %v2479 = vsel %vm2447, %v960, 0.0
  %v2480 = vsel %vm2448, %v963, 0.0
  %v2481 = vsel %vm2449, %v965, 0.0
  %v2482 = vsel %vm2450, %v968, 0.0
  %v2483 = vsel %vm2451, %v970, 0.0
  %v2484 = vsel %vm2452, %v973, 0.0
  %v2485 = vsel %vm2453, %v975, 0.0
  %v2486 = vsel %vm2454, %v978, 0.0
  %v2487 = vsel %vm2455, %v980, 0.0
  %v2488 = vsel %vm2456, %v983, 0.0
  %v2489 = vsel %vm2457, %v985, 0.0
  %v2490 = vsel %vm2458, %v988, 0.0
  %v2491 = vsel %vm2459, %v990, 0.0
  %v2492 = vsel %vm2460, %v993, 0.0
  %v2493 = vsel %vm2461, %v995, 0.0
  %v2494 = vsel %vm2462, %v998, 0.0
  %v2495 = vsel %vm2463, %v1000, 0.0
  %v2496 = vsel %vm2464, %v1003, 0.0
  %v2497 = vsel %vm2465, %v1005, 0.0
  %v2498 = vrot.slane %v2466, 4
  %v2499 = vadd.f32 %v2466, %v2498
  %v2500 = vrot.slane %v2499, 2
  %v2501 = vadd.f32 %v2499, %v2500
  %v2502 = vrot.slane %v2501, 1
  %v2503 = vadd.f32 %v2501, %v2502
  %v2504 = vrot.slane %v2467, 4
  %v2505 = vadd.f32 %v2467, %v2504
  %v2506 = vrot.slane %v2505, 2
  %v2507 = vadd.f32 %v2505, %v2506
  %v2508 = vrot.slane %v2507, 1
  %v2509 = vadd.f32 %v2507, %v2508
  %v2510 = vrot.slane %v2468, 4
  %v2511 = vadd.f32 %v2468, %v2510
  %v2512 = vrot.slane %v2511, 2
  %v2513 = vadd.f32 %v2511, %v2512
  %v2514 = vrot.slane %v2513, 1
  %v2515 = vadd.f32 %v2513, %v2514
  %v2516 = vrot.slane %v2469, 4
  %v2517 = vadd.f32 %v2469, %v2516
  %v2518 = vrot.slane %v2517, 2
  %v2519 = vadd.f32 %v2517, %v2518
  %v2520 = vrot.slane %v2519, 1
  %v2521 = vadd.f32 %v2519, %v2520
  %v2522 = vrot.slane %v2470, 4
  %v2523 = vadd.f32 %v2470, %v2522
  %v2524 = vrot.slane %v2523, 2
  %v2525 = vadd.f32 %v2523, %v2524
  %v2526 = vrot.slane %v2525, 1
  %v2527 = vadd.f32 %v2525, %v2526
  %v2528 = vrot.slane %v2471, 4
  %v2529 = vadd.f32 %v2471, %v2528
  %v2530 = vrot.slane %v2529, 2
  %v2531 = vadd.f32 %v2529, %v2530
  %v2532 = vrot.slane %v2531, 1
  %v2533 = vadd.f32 %v2531, %v2532
  %v2534 = vrot.slane %v2472, 4
  %v2535 = vadd.f32 %v2472, %v2534
  %v2536 = vrot.slane %v2535, 2
  %v2537 = vadd.f32 %v2535, %v2536
  %v2538 = vrot.slane %v2537, 1
  %v2539 = vadd.f32 %v2537, %v2538
  %v2540 = vrot.slane %v2473, 4
  %v2541 = vadd.f32 %v2473, %v2540
  %v2542 = vrot.slane %v2541, 2
  %v2543 = vadd.f32 %v2541, %v2542
  %v2544 = vrot.slane %v2543, 1
  %v2545 = vadd.f32 %v2543, %v2544
  %v2546 = vrot.slane %v2474, 4
  %v2547 = vadd.f32 %v2474, %v2546
  %v2548 = vrot.slane %v2547, 2
  %v2549 = vadd.f32 %v2547, %v2548
  %v2550 = vrot.slane %v2549, 1
  %v2551 = vadd.f32 %v2549, %v2550
  %v2552 = vrot.slane %v2475, 4
  %v2553 = vadd.f32 %v2475, %v2552
  %v2554 = vrot.slane %v2553, 2
  %v2555 = vadd.f32 %v2553, %v2554
  %v2556 = vrot.slane %v2555, 1
  %v2557 = vadd.f32 %v2555, %v2556
  %v2558 = vrot.slane %v2476, 4
  %v2559 = vadd.f32 %v2476, %v2558
  %v2560 = vrot.slane %v2559, 2
  %v2561 = vadd.f32 %v2559, %v2560
  %v2562 = vrot.slane %v2561, 1
  %v2563 = vadd.f32 %v2561, %v2562
  %v2564 = vrot.slane %v2477, 4
  %v2565 = vadd.f32 %v2477, %v2564
  %v2566 = vrot.slane %v2565, 2
  %v2567 = vadd.f32 %v2565, %v2566
  %v2568 = vrot.slane %v2567, 1
  %v2569 = vadd.f32 %v2567, %v2568
  %v2570 = vrot.slane %v2478, 4
  %v2571 = vadd.f32 %v2478, %v2570
  %v2572 = vrot.slane %v2571, 2
  %v2573 = vadd.f32 %v2571, %v2572
  %v2574 = vrot.slane %v2573, 1
  %v2575 = vadd.f32 %v2573, %v2574
  %v2576 = vrot.slane %v2479, 4
  %v2577 = vadd.f32 %v2479, %v2576
  %v2578 = vrot.slane %v2577, 2
  %v2579 = vadd.f32 %v2577, %v2578
  %v2580 = vrot.slane %v2579, 1
  %v2581 = vadd.f32 %v2579, %v2580
  %v2582 = vrot.slane %v2480, 4
  %v2583 = vadd.f32 %v2480, %v2582
  %v2584 = vrot.slane %v2583, 2
  %v2585 = vadd.f32 %v2583, %v2584
  %v2586 = vrot.slane %v2585, 1
  %v2587 = vadd.f32 %v2585, %v2586
  %v2588 = vrot.slane %v2481, 4
  %v2589 = vadd.f32 %v2481, %v2588
  %v2590 = vrot.slane %v2589, 2
  %v2591 = vadd.f32 %v2589, %v2590
  %v2592 = vrot.slane %v2591, 1
  %v2593 = vadd.f32 %v2591, %v2592
  %v2594 = vrot.slane %v2482, 4
  %v2595 = vadd.f32 %v2482, %v2594
  %v2596 = vrot.slane %v2595, 2
  %v2597 = vadd.f32 %v2595, %v2596
  %v2598 = vrot.slane %v2597, 1
  %v2599 = vadd.f32 %v2597, %v2598
  %v2600 = vrot.slane %v2483, 4
  %v2601 = vadd.f32 %v2483, %v2600
  %v2602 = vrot.slane %v2601, 2
  %v2603 = vadd.f32 %v2601, %v2602
  %v2604 = vrot.slane %v2603, 1
  %v2605 = vadd.f32 %v2603, %v2604
  %v2606 = vrot.slane %v2484, 4
  %v2607 = vadd.f32 %v2484, %v2606
  %v2608 = vrot.slane %v2607, 2
  %v2609 = vadd.f32 %v2607, %v2608
  %v2610 = vrot.slane %v2609, 1
  %v2611 = vadd.f32 %v2609, %v2610
  %v2612 = vrot.slane %v2485, 4
  %v2613 = vadd.f32 %v2485, %v2612
  %v2614 = vrot.slane %v2613, 2
  %v2615 = vadd.f32 %v2613, %v2614
  %v2616 = vrot.slane %v2615, 1
  %v2617 = vadd.f32 %v2615, %v2616
  %v2618 = vrot.slane %v2486, 4
  %v2619 = vadd.f32 %v2486, %v2618
  %v2620 = vrot.slane %v2619, 2
  %v2621 = vadd.f32 %v2619, %v2620
  %v2622 = vrot.slane %v2621, 1
  %v2623 = vadd.f32 %v2621, %v2622
  %v2624 = vrot.slane %v2487, 4
  %v2625 = vadd.f32 %v2487, %v2624
  %v2626 = vrot.slane %v2625, 2
  %v2627 = vadd.f32 %v2625, %v2626
  %v2628 = vrot.slane %v2627, 1
  %v2629 = vadd.f32 %v2627, %v2628
  %v2630 = vrot.slane %v2488, 4
  %v2631 = vadd.f32 %v2488, %v2630
  %v2632 = vrot.slane %v2631, 2
  %v2633 = vadd.f32 %v2631, %v2632
  %v2634 = vrot.slane %v2633, 1
  %v2635 = vadd.f32 %v2633, %v2634
  %v2636 = vrot.slane %v2489, 4
  %v2637 = vadd.f32 %v2489, %v2636
  %v2638 = vrot.slane %v2637, 2
  %v2639 = vadd.f32 %v2637, %v2638
  %v2640 = vrot.slane %v2639, 1
  %v2641 = vadd.f32 %v2639, %v2640
  %v2642 = vrot.slane %v2490, 4
  %v2643 = vadd.f32 %v2490, %v2642
  %v2644 = vrot.slane %v2643, 2
  %v2645 = vadd.f32 %v2643, %v2644
  %v2646 = vrot.slane %v2645, 1
  %v2647 = vadd.f32 %v2645, %v2646
  %v2648 = vrot.slane %v2491, 4
  %v2649 = vadd.f32 %v2491, %v2648
  %v2650 = vrot.slane %v2649, 2
  %v2651 = vadd.f32 %v2649, %v2650
  %v2652 = vrot.slane %v2651, 1
  %v2653 = vadd.f32 %v2651, %v2652
  %v2654 = vrot.slane %v2492, 4
  %v2655 = vadd.f32 %v2492, %v2654
  %v2656 = vrot.slane %v2655, 2
  %v2657 = vadd.f32 %v2655, %v2656
  %v2658 = vrot.slane %v2657, 1
  %v2659 = vadd.f32 %v2657, %v2658
  %v2660 = vrot.slane %v2493, 4
  %v2661 = vadd.f32 %v2493, %v2660
  %v2662 = vrot.slane %v2661, 2
  %v2663 = vadd.f32 %v2661, %v2662
  %v2664 = vrot.slane %v2663, 1
  %v2665 = vadd.f32 %v2663, %v2664
  %v2666 = vrot.slane %v2494, 4
  %v2667 = vadd.f32 %v2494, %v2666
  %v2668 = vrot.slane %v2667, 2
  %v2669 = vadd.f32 %v2667, %v2668
  %v2670 = vrot.slane %v2669, 1
  %v2671 = vadd.f32 %v2669, %v2670
  %v2672 = vrot.slane %v2495, 4
  %v2673 = vadd.f32 %v2495, %v2672
  %v2674 = vrot.slane %v2673, 2
  %v2675 = vadd.f32 %v2673, %v2674
  %v2676 = vrot.slane %v2675, 1
  %v2677 = vadd.f32 %v2675, %v2676
  %v2678 = vrot.slane %v2496, 4
  %v2679 = vadd.f32 %v2496, %v2678
  %v2680 = vrot.slane %v2679, 2
  %v2681 = vadd.f32 %v2679, %v2680
  %v2682 = vrot.slane %v2681, 1
  %v2683 = vadd.f32 %v2681, %v2682
  %v2684 = vrot.slane %v2497, 4
  %v2685 = vadd.f32 %v2497, %v2684
  %v2686 = vrot.slane %v2685, 2
  %v2687 = vadd.f32 %v2685, %v2686
  %v2688 = vrot.slane %v2687, 1
  %v2689 = vadd.f32 %v2687, %v2688
  %v2722 = vsel %vm2227, %v2509, %v2503
  %v2723 = vsel %vm2229, %v2515, %v2722
  %v2724 = vsel %vm2231, %v2521, %v2723
  %v2725 = vsel %vm2233, %v2527, %v2724
  %v2726 = vsel %vm2235, %v2533, %v2725
  %v2727 = vsel %vm2237, %v2539, %v2726
  %v2728 = vsel %vm2239, %v2545, %v2727
  %v2729 = vsel %vm2227, %v2557, %v2551
  %v2730 = vsel %vm2229, %v2563, %v2729
  %v2731 = vsel %vm2231, %v2569, %v2730
  %v2732 = vsel %vm2233, %v2575, %v2731
  %v2733 = vsel %vm2235, %v2581, %v2732
  %v2734 = vsel %vm2237, %v2587, %v2733
  %v2735 = vsel %vm2239, %v2593, %v2734
  %v2736 = vsel %vm2227, %v2605, %v2599
  %v2737 = vsel %vm2229, %v2611, %v2736
  %v2738 = vsel %vm2231, %v2617, %v2737
  %v2739 = vsel %vm2233, %v2623, %v2738
  %v2740 = vsel %vm2235, %v2629, %v2739
  %v2741 = vsel %vm2237, %v2635, %v2740
  %v2742 = vsel %vm2239, %v2641, %v2741
  %v2743 = vsel %vm2227, %v2653, %v2647
  %v2744 = vsel %vm2229, %v2659, %v2743
  %v2745 = vsel %vm2231, %v2665, %v2744
  %v2746 = vsel %vm2233, %v2671, %v2745
  %v2747 = vsel %vm2235, %v2677, %v2746
  %v2748 = vsel %vm2237, %v2683, %v2747
  %v2749 = vsel %vm2239, %v2689, %v2748
  %2754 = vst [vmem:[%s6] sm:$0xff] %v2728
  %2755 = vst [vmem:[%s6 + $0x8] sm:$0xff] %v2735
  %2756 = vst [vmem:[%s6 + $0x10] sm:$0xff] %v2742
  %2757 = vst [vmem:[%s6 + $0x18] sm:$0xff] %v2749
  // Predicated region
  $region26: #{timeseries_autoencoder_forward.1} parent=0 // pred_check
    _
  $region27: #{timeseries_autoencoder_forward.1} parent=0 // pred_check_branch
    %2759 = sbr.rel (0) target = $region29
  $region28: #{timeseries_autoencoder_forward.1} parent=0 // pred_region
    _
  $region29: #{timeseries_autoencoder_forward.1} parent=0 // pred_fallthru
    _
  // Predicated region
  $region30: #{timeseries_autoencoder_forward.1} parent=0 // pred_check
    _
  $region31: #{timeseries_autoencoder_forward.1} parent=0 // pred_check_branch
    %2761 = sbr.rel (0) target = $region33
  $region32: #{timeseries_autoencoder_forward.1} parent=0 // pred_region
    _
  $region33: #{timeseries_autoencoder_forward.1} parent=0 // pred_fallthru
    _
  // Predicated region
  $region34: #{timeseries_autoencoder_forward.1} parent=0 // pred_check
    _
  $region35: #{timeseries_autoencoder_forward.1} parent=0 // pred_check_branch
    %2763 = sbr.rel (0) target = $region37
  $region36: #{timeseries_autoencoder_forward.1} parent=0 // pred_region
    _
  $region37: #{timeseries_autoencoder_forward.1} parent=0 // pred_fallthru
    _
  // Predicated region
  $region38: #{timeseries_autoencoder_forward.1} parent=0 // pred_check
    _
  $region39: #{timeseries_autoencoder_forward.1} parent=0 // pred_check_branch
    %2765 = sbr.rel (0) target = $region41
  $region40: #{timeseries_autoencoder_forward.1} parent=0 // pred_region
    _
  $region41: #{timeseries_autoencoder_forward.1} parent=0 // pred_fallthru
    _

</llo_original>
